<compile_context>
chip_gen: v5e
topology: v5e:2x2
jax: 0.10.0
libtpu: 0.0.40
codegen_flags: <defaults>
</compile_context>

<pallas_src>
import math
import functools

import numpy as np
import jax
import jax.numpy as jnp
from jax import lax
from jax.experimental import pallas as pl
from jax.experimental.pallas import tpu as pltpu

MATMUL_DTYPE = jnp.float32   # flip to jnp.bfloat16 for speed (f32 accumulation is kept)


# ----------------------------- skew helper (O(S^2)) -----------------------------
#
# Srel[i, j] = QE_masked[i, (j - (i + 1)) mod S]  (rows right-rolled by i+1), where
# QE_masked[i, m] = QE[i, m] if m >= S-1-i else 0.  This reproduces the reference's
# qe-masking + pad/reshape skew exactly (including the zeros above the diagonal).

def _probe_roll_skew():
    """Verify pltpu.roll(x, 1, axis=1, stride=1, stride_axis=0) == np.roll row i by 1+i."""
    S = 8
    x = np.tile(np.arange(S, dtype=np.float32), (S, 1))
    want = np.stack([np.roll(x[i], 1 + i) for i in range(S)])

    def k(x_ref, o_ref):
        o_ref[...] = pltpu.roll(x_ref[...], 1, 1, stride=1, stride_axis=0)

    try:
        got = pl.pallas_call(
            k, out_shape=jax.ShapeDtypeStruct((S, S), jnp.float32))(jnp.asarray(x))
        return bool(np.array_equal(np.asarray(jax.block_until_ready(got)), want))
    except Exception:
        return False


_ROLL_SKEW_OK = _probe_roll_skew()


def _skew(qe_masked, seq):
    """Per-row right-rotation of qe_masked (S, S) by (row_index + 1) mod S."""
    if _ROLL_SKEW_OK:
        # Strided XLU rotate: row i rolled by 1 + i (taken mod S).
        return pltpu.roll(qe_masked, 1, 1, stride=1, stride_axis=0)
    # Exact fallback: log-step barrel shifter built from static lane slices + selects.
    row = lax.broadcasted_iota(jnp.int32, (seq, 1), 0)
    amount = (row + 1) % seq
    y = qe_masked
    k = 1
    while k < seq:
        rolled = jnp.concatenate([y[:, seq - k:], y[:, :seq - k]], axis=1)
        y = jnp.where((amount & k) != 0, rolled, y)
        k <<= 1
    return y


# ----------------------------- tiled linear (MXU) -----------------------------

def _pick_tile(dim, target):
    """Use `target` when it tiles `dim` evenly, otherwise take the full dimension."""
    return target if (dim > target and dim % target == 0) else dim


def _linear_kernel(x_ref, w_ref, b_ref, o_ref, acc_ref, *, activation):
    @pl.when(pl.program_id(2) == 0)
    def _():
        acc_ref[...] = jnp.zeros_like(acc_ref)

    acc_ref[...] += jnp.dot(x_ref[...], w_ref[...],
                            preferred_element_type=jnp.float32)

    @pl.when(pl.program_id(2) == pl.num_programs(2) - 1)
    def _():
        y = acc_ref[...] + b_ref[...]
        if activation == "relu":
            y = jnp.maximum(y, 0.0)
        o_ref[...] = y.astype(o_ref.dtype)


def linear(x, w, b, activation="none", *, tm=256, tn=256, tk=512):
    # x: (M, K), w: (K, N), b: (1, N) -> (M, N)
    M, K = x.shape
    _, N = w.shape
    tm, tn, tk = _pick_tile(M, tm), _pick_tile(N, tn), _pick_tile(K, tk)
    return pl.pallas_call(
        functools.partial(_linear_kernel, activation=activation),
        out_shape=jax.ShapeDtypeStruct((M, N), jnp.float32),
        grid=(M // tm, N // tn, K // tk),
        in_specs=[
            pl.BlockSpec((tm, tk), lambda i, j, k: (i, k)),
            pl.BlockSpec((tk, tn), lambda i, j, k: (k, j)),
            pl.BlockSpec((1, tn), lambda i, j, k: (0, j)),
        ],
        out_specs=pl.BlockSpec((tm, tn), lambda i, j, k: (i, j)),
        scratch_shapes=[pltpu.VMEM((tm, tn), jnp.float32)],
        compiler_params=pltpu.CompilerParams(
            dimension_semantics=("parallel", "parallel", "arbitrary")),
    )(x.astype(MATMUL_DTYPE), w.astype(MATMUL_DTYPE), b)


# ---------------- tiled linear with fused residual-add + LayerNorm epilogue ----------------

def _linear_add_ln_kernel(x_ref, w_ref, b_ref, r_ref, g_ref, bb_ref, o_ref, acc_ref, *, eps):
    @pl.when(pl.program_id(1) == 0)
    def _():
        acc_ref[...] = jnp.zeros_like(acc_ref)

    acc_ref[...] += jnp.dot(x_ref[...], w_ref[...],
                            preferred_element_type=jnp.float32)

    @pl.when(pl.program_id(1) == pl.num_programs(1) - 1)
    def _():
        z = acc_ref[...] + b_ref[...] + r_ref[...]          # matmul + bias + residual
        mu = jnp.mean(z, axis=-1, keepdims=True)
        zc = z - mu
        var = jnp.mean(zc * zc, axis=-1, keepdims=True)     # biased var (PyTorch LN)
        o_ref[...] = (zc * lax.rsqrt(var + eps) * g_ref[...] + bb_ref[...]).astype(o_ref.dtype)


def linear_add_layernorm(x, w, b, residual, gamma, beta, *, eps=1e-6, tm=256, tk=512):
    # out = LayerNorm(x @ w + b + residual); the N (=d_model) axis is kept whole so the
    # LN reduction lives entirely in the matmul epilogue.
    M, K = x.shape
    _, N = w.shape
    tm, tk = _pick_tile(M, tm), _pick_tile(K, tk)
    return pl.pallas_call(
        functools.partial(_linear_add_ln_kernel, eps=eps),
        out_shape=jax.ShapeDtypeStruct((M, N), jnp.float32),
        grid=(M // tm, K // tk),
        in_specs=[
            pl.BlockSpec((tm, tk), lambda i, k: (i, k)),
            pl.BlockSpec((tk, N), lambda i, k: (k, 0)),
            pl.BlockSpec((1, N), lambda i, k: (0, 0)),
            pl.BlockSpec((tm, N), lambda i, k: (i, 0)),
            pl.BlockSpec((1, N), lambda i, k: (0, 0)),
            pl.BlockSpec((1, N), lambda i, k: (0, 0)),
        ],
        out_specs=pl.BlockSpec((tm, N), lambda i, k: (i, 0)),
        scratch_shapes=[pltpu.VMEM((tm, N), jnp.float32)],
        compiler_params=pltpu.CompilerParams(
            dimension_semantics=("parallel", "arbitrary")),
    )(x.astype(MATMUL_DTYPE), w.astype(MATMUL_DTYPE), b, residual, gamma, beta)


# ----------------------------- relative global attention -----------------------------

def _rel_attention_kernel(qkv_ref, e_ref, pad_ref, o_ref, *,
                          n_head, seq, d_model, dh, scale):
    x = qkv_ref[0]                      # (S, 3D) fused Q|K|V activations for batch row b
    e = e_ref[...]                      # (S, dh) relative position embeddings (shared heads)
    pad = pad_ref[0]                    # (1, S) float, 1.0 where key position is a pad token

    # Causal + padding mask, regenerated in-kernel (no (B,S,S) HBM mask).
    ii = lax.broadcasted_iota(jnp.int32, (seq, seq), 0)
    jj = lax.broadcasted_iota(jnp.int32, (seq, seq), 1)
    masked = jnp.logical_or(jj > ii, pad > 0.5)
    neg = jnp.where(masked, jnp.float32(-1e30), jnp.float32(0.0))

    # qe-masking pattern for the skew: keep column m only where m >= S-1-i.
    keep_qe = (jj >= (seq - 1 - ii)).astype(jnp.float32)

    outs = []
    for h in range(n_head):
        q = x[:, h * dh:(h + 1) * dh]
        k = x[:, d_model + h * dh:d_model + (h + 1) * dh]
        v = x[:, 2 * d_model + h * dh:2 * d_model + (h + 1) * dh]

        # QE = einsum('ld,md->lm'); mask then skew (O(S^2)).
        qe = lax.dot_general(q, e, (((1,), (1,)), ((), ())),
                             preferred_element_type=jnp.float32)
        srel = _skew(qe * keep_qe, seq)

        qkt = lax.dot_general(q, k, (((1,), (1,)), ((), ())),
                              preferred_element_type=jnp.float32)
        logits = (qkt + srel) * scale + neg

        mx = jnp.max(logits, axis=-1, keepdims=True)
        p = jnp.exp(logits - mx)
        denom = jnp.sum(p, axis=-1, keepdims=True)
        attn = p * pl.reciprocal(denom, approx=False)
        outs.append(jnp.dot(attn, v, preferred_element_type=jnp.float32))

    # Heads re-packed in-kernel -> lane-dense (S, D) store, no host transpose.
    o_ref[0] = jnp.concatenate(outs, axis=-1).astype(o_ref.dtype)


def relative_attention(qkv, e, pad, *, n_head):
    # qkv: (B, S, 3D); e: (S, dh); pad: (B, 1, S) float (1.0 = pad) -> (B, S, D)
    B, S, threeD = qkv.shape
    D = threeD // 3
    dh = D // n_head
    return pl.pallas_call(
        functools.partial(_rel_attention_kernel, n_head=n_head, seq=S,
                          d_model=D, dh=dh, scale=1.0 / math.sqrt(dh)),
        out_shape=jax.ShapeDtypeStruct((B, S, D), jnp.float32),
        grid=(B,),
        in_specs=[
            pl.BlockSpec((1, S, threeD), lambda b: (b, 0, 0)),
            pl.BlockSpec((S, dh), lambda b: (0, 0)),
            pl.BlockSpec((1, 1, S), lambda b: (b, 0, 0)),
        ],
        out_specs=pl.BlockSpec((1, S, D), lambda b: (b, 0, 0)),
        compiler_params=pltpu.CompilerParams(dimension_semantics=("parallel",)),
    )(qkv, e, pad)


# ----------------------------- model glue (plain JAX) -----------------------------

def sinusoid_pe(max_seq, embedding_dim):
    pe = np.array([[[math.sin(pos * math.exp(-math.log(10000) * i / embedding_dim)
                              * math.exp(math.log(10000) / embedding_dim * (i % 2))
                              + 0.5 * math.pi * (i % 2))
                     for i in range(embedding_dim)]
                    for pos in range(max_seq)]])
    return jnp.asarray(pe, dtype=jnp.float32)          # (1, max_seq, E)


def init_params(key, *, vocab, d_model, d_inner, n_layer, n_head, max_seq, pad_token):
    dh = d_model // n_head
    keys = jax.random.split(key, 2 + n_layer)

    def u(k, shape, s):
        return jax.random.uniform(k, shape, jnp.float32, -s, s)

    emb = u(keys[0], (vocab, d_model), 0.1).at[pad_token].set(0.0)   # padding_idx row

    layers = []
    s = 1.0 / math.sqrt(d_model)
    si = 1.0 / math.sqrt(d_inner)
    for li in range(n_layer):
        lk = jax.random.split(keys[2 + li], 13)
        Wq, Wk, Wv = (u(lk[0], (d_model, d_model), s),
                      u(lk[1], (d_model, d_model), s),
                      u(lk[2], (d_model, d_model), s))
        bq, bk, bv = (u(lk[3], (1, d_model), s),
                      u(lk[4], (1, d_model), s),
                      u(lk[5], (1, d_model), s))
        layers.append({
            "Wqkv": jnp.concatenate([Wq, Wk, Wv], axis=1),   # fused QKV projection
            "bqkv": jnp.concatenate([bq, bk, bv], axis=1),
            "Wo": u(lk[6], (d_model, d_model), s), "bo": u(lk[7], (1, d_model), s),
            "E":  jax.random.normal(lk[8], (max_seq, dh), jnp.float32),
            "W1": u(lk[9], (d_model, d_inner), s), "b1": u(lk[10], (1, d_inner), s),
            "W2": u(lk[11], (d_inner, d_model), si), "b2": u(lk[12], (1, d_model), si),
            "ln1_g": jnp.ones((1, d_model), jnp.float32),
            "ln1_b": jnp.zeros((1, d_model), jnp.float32),
            "ln2_g": jnp.ones((1, d_model), jnp.float32),
            "ln2_b": jnp.zeros((1, d_model), jnp.float32),
        })

    fc_w = u(keys[1], (d_model, vocab), 0.1)
    fc_b = jnp.zeros((1, vocab), jnp.float32)
    pos = sinusoid_pe(max_seq, d_model)
    return {"embedding": emb, "layers": layers, "fc_w": fc_w, "fc_b": fc_b, "pos": pos}


def music_transformer_forward(params, tokens, condition, *, n_head, max_seq, pad_token):
    # tokens: (B, S) int32; condition unused (d_condition == 0 path).
    del condition
    B, S = tokens.shape
    D = params["embedding"].shape[1]

    # Tiny pad-flag tensor; the full (B,S,S) causal+pad mask is rebuilt inside the kernel.
    pad = (tokens == pad_token).astype(jnp.float32).reshape(B, 1, S)

    # Embedding gather + scale + sinusoidal positions (XLA glue); dropout = identity.
    x = params["embedding"][tokens] * math.sqrt(D) + params["pos"][:, :S, :]
    x2 = x.reshape(B * S, D)

    for lp in params["layers"]:
        e = lp["E"][max(0, max_seq - S):]                     # (S, dh) left embeddings
        qkv = linear(x2, lp["Wqkv"], lp["bqkv"])              # fused QKV projection
        attn = relative_attention(qkv.reshape(B, S, 3 * D), e, pad, n_head=n_head)
        out1 = linear_add_layernorm(attn.reshape(B * S, D), lp["Wo"], lp["bo"],
                                    x2, lp["ln1_g"], lp["ln1_b"])       # Wo + add + LN1
        h = linear(out1, lp["W1"], lp["b1"], activation="relu")          # FFN pre + ReLU
        x2 = linear_add_layernorm(h, lp["W2"], lp["b2"],
                                  out1, lp["ln2_g"], lp["ln2_b"])        # W2 + add + LN2

    logits = linear(x2, params["fc_w"], params["fc_b"])
    return logits.reshape(B, S, -1)


# TODO(synk): the d_condition > 0 branch of the reference (0.5*Linear + 0.5*Linear and
#             torch.nn.MultiheadAttention(condition, x, x)) is not executable PyTorch and
#             is therefore not implemented.

if __name__ == "__main__":
    B, S = 2, 8
    d_model, d_inner = 32, 64
    n_head, n_layer = 4, 2
    vocab, max_seq, pad_token = 40, 8, 0

    key = jax.random.PRNGKey(0)
    pkey, tkey, ckey = jax.random.split(key, 3)
    params = init_params(pkey, vocab=vocab, d_model=d_model, d_inner=d_inner,
                         n_layer=n_layer, n_head=n_head, max_seq=max_seq,
                         pad_token=pad_token)

    tokens = jax.random.randint(tkey, (B, S), 1, vocab, dtype=jnp.int32)  # no pads
    condition = jax.random.normal(ckey, (B, 4), jnp.float32)              # unused (d_condition=0)

    fwd = jax.jit(functools.partial(music_transformer_forward,
                                    n_head=n_head, max_seq=max_seq, pad_token=pad_token))
    out = jax.block_until_ready(fwd(params, tokens, condition))
    assert out.shape == (B, S, vocab) and out.dtype == jnp.float32
    assert bool(jnp.all(jnp.isfinite(out)))
    print("KERNEL_OK")
</pallas_src>

<mosaic_0001>
module attributes {stable_mosaic.version = 11 : i64} {
  func.func @k(%arg0: memref<8x8xf32, #tpu.memory_space<vmem>>, %arg1: memref<8x8xf32, #tpu.memory_space<vmem>>) attributes {dimension_semantics = [], scalar_prefetch = 0 : i64, scratch_operands = 0 : i64, tpu.core_type = #tpu.core_type<tc>} {
    %c0 = arith.constant 0 : index
    %c0_0 = arith.constant 0 : index
    %0 = vector.load %arg0[%c0, %c0_0] : memref<8x8xf32, #tpu.memory_space<vmem>>, vector<8x8xf32>
    %c1_i32 = arith.constant 1 : i32
    %1 = tpu.dynamic_rotate %0 by %c1_i32 dim 1 {stride = 1 : si32, stride_dimension = 0 : si32} : vector<8x8xf32>, i32 -> vector<8x8xf32>
    %c0_1 = arith.constant 0 : index
    %c0_2 = arith.constant 0 : index
    %2 = vector.load %arg1[%c0_1, %c0_2] : memref<8x8xf32, #tpu.memory_space<vmem>>, vector<8x8xf32>
    tpu.vector_store %arg1[%c0_1, %c0_2], %1 {strides = array<i32>} : memref<8x8xf32, #tpu.memory_space<vmem>>, vector<8x8xf32>,
    return
  }
}

module attributes {stable_mosaic.version = 11 : i64} {
  func.func @_linear_kernel(%arg0: i32, %arg1: i32, %arg2: i32, %arg3: memref<16x32xf32, #tpu.memory_space<vmem>>, %arg4: memref<32x96xf32, #tpu.memory_space<vmem>>, %arg5: memref<1x96xf32, #tpu.memory_space<vmem>>, %arg6: memref<16x96xf32, #tpu.memory_space<vmem>>, %arg7: memref<16x96xf32, #tpu.memory_space<vmem>>) attributes {dimension_semantics = [#tpu.dimension_semantics<parallel>, #tpu.dimension_semantics<parallel>, #tpu.dimension_semantics<arbitrary>], iteration_bounds = array<i64: 1, 1, 1>, scalar_prefetch = 0 : i64, scratch_operands = 1 : i64, tpu.core_type = #tpu.core_type<tc>, window_params = [{transform_indices = @transform_0, window_bounds = array<i64: 16, 32>}, {transform_indices = @transform_1, window_bounds = array<i64: 32, 96>}, {transform_indices = @transform_2, window_bounds = array<i64: 1, 96>}, {transform_indices = @transform_3, window_bounds = array<i64: 16, 96>}]} {
    %c0_i32 = arith.constant 0 : i32
    %0 = arith.cmpi eq, %arg2, %c0_i32 : i32
    %1 = arith.extui %0 : i1 to i32
    %c0_i32_0 = arith.constant 0 : i32
    %2 = arith.cmpi ne, %1, %c0_i32_0 : i32
    scf.if %2 {
      %cst_10 = arith.constant 0.000000e+00 : f32
      %12 = vector.broadcast %cst_10 : f32 to vector<16x96xf32>
      %c0_11 = arith.constant 0 : index
      %c0_12 = arith.constant 0 : index
      %13 = vector.load %arg7[%c0_11, %c0_12] : memref<16x96xf32, #tpu.memory_space<vmem>>, vector<16x96xf32>
      tpu.vector_store %arg7[%c0_11, %c0_12], %12 {strides = array<i32>} : memref<16x96xf32, #tpu.memory_space<vmem>>, vector<16x96xf32>,
    } else {
    }
    %c0 = arith.constant 0 : index
    %c0_1 = arith.constant 0 : index
    %3 = vector.load %arg7[%c0, %c0_1] : memref<16x96xf32, #tpu.memory_space<vmem>>, vector<16x96xf32>
    %c0_2 = arith.constant 0 : index
    %c0_3 = arith.constant 0 : index
    %4 = vector.load %arg3[%c0_2, %c0_3] : memref<16x32xf32, #tpu.memory_space<vmem>>, vector<16x32xf32>
    %c0_4 = arith.constant 0 : index
    %c0_5 = arith.constant 0 : index
    %5 = vector.load %arg4[%c0_4, %c0_5] : memref<32x96xf32, #tpu.memory_space<vmem>>, vector<32x96xf32>
    %cst = arith.constant dense<0.000000e+00> : vector<16x96xf32>
    %6 = tpu.matmul %4, %5, %cst {dimension_numbers = #tpu.dot_dimension_numbers<[1], [0], [0], [1], [0, 0, 1, 1], [], []>} : vector<16x32xf32>, vector<32x96xf32>, vector<16x96xf32> -> vector<16x96xf32>
    %7 = arith.addf %3, %6 : vector<16x96xf32>
    %c0_6 = arith.constant 0 : index
    %c0_7 = arith.constant 0 : index
    %8 = vector.load %arg7[%c0_6, %c0_7] : memref<16x96xf32, #tpu.memory_space<vmem>>, vector<16x96xf32>
    tpu.vector_store %arg7[%c0_6, %c0_7], %7 {strides = array<i32>} : memref<16x96xf32, #tpu.memory_space<vmem>>, vector<16x96xf32>,
    %c0_i32_8 = arith.constant 0 : i32
    %9 = arith.cmpi eq, %arg2, %c0_i32_8 : i32
    %10 = arith.extui %9 : i1 to i32
    %c0_i32_9 = arith.constant 0 : i32
    %11 = arith.cmpi ne, %10, %c0_i32_9 : i32
    scf.if %11 {
      %c0_10 = arith.constant 0 : index
      %c0_11 = arith.constant 0 : index
      %12 = vector.load %arg7[%c0_10, %c0_11] : memref<16x96xf32, #tpu.memory_space<vmem>>, vector<16x96xf32>
      %c0_12 = arith.constant 0 : index
      %c0_13 = arith.constant 0 : index
      %13 = vector.load %arg5[%c0_12, %c0_13] : memref<1x96xf32, #tpu.memory_space<vmem>>, vector<1x96xf32>
      %14 = vector.broadcast %13 : vector<1x96xf32> to vector<16x96xf32>
      %15 = arith.addf %12, %14 : vector<16x96xf32>
      %c0_14 = arith.constant 0 : index
      %c0_15 = arith.constant 0 : index
      %16 = vector.load %arg6[%c0_14, %c0_15] : memref<16x96xf32, #tpu.memory_space<vmem>>, vector<16x96xf32>
      tpu.vector_store %arg6[%c0_14, %c0_15], %15 {strides = array<i32>} : memref<16x96xf32, #tpu.memory_space<vmem>>, vector<16x96xf32>,
    } else {
    }
    return
  }
  func.func @transform_0(%arg0: i32, %arg1: i32, %arg2: i32) -> (i32, i32) {
    %c0_i32 = arith.constant 0 : i32
    return %arg0, %arg2 : i32, i32
  }
  func.func @transform_1(%arg0: i32, %arg1: i32, %arg2: i32) -> (i32, i32) {
    %c0_i32 = arith.constant 0 : i32
    return %arg2, %arg1 : i32, i32
  }
  func.func @transform_2(%arg0: i32, %arg1: i32, %arg2: i32) -> (i32, i32) {
    %c0_i32 = arith.constant 0 : i32
    %c0_i32_0 = arith.constant 0 : i32
    return %c0_i32, %arg1 : i32, i32
  }
  func.func @transform_3(%arg0: i32, %arg1: i32, %arg2: i32) -> (i32, i32) {
    %c0_i32 = arith.constant 0 : i32
    return %arg0, %arg1 : i32, i32
  }
}

module attributes {stable_mosaic.version = 11 : i64} {
  func.func @_linear_kernel(%arg0: i32, %arg1: i32, %arg2: i32, %arg3: memref<16x32xf32, #tpu.memory_space<vmem>>, %arg4: memref<32x64xf32, #tpu.memory_space<vmem>>, %arg5: memref<1x64xf32, #tpu.memory_space<vmem>>, %arg6: memref<16x64xf32, #tpu.memory_space<vmem>>, %arg7: memref<16x64xf32, #tpu.memory_space<vmem>>) attributes {dimension_semantics = [#tpu.dimension_semantics<parallel>, #tpu.dimension_semantics<parallel>, #tpu.dimension_semantics<arbitrary>], iteration_bounds = array<i64: 1, 1, 1>, scalar_prefetch = 0 : i64, scratch_operands = 1 : i64, tpu.core_type = #tpu.core_type<tc>, window_params = [{transform_indices = @transform_0, window_bounds = array<i64: 16, 32>}, {transform_indices = @transform_1, window_bounds = array<i64: 32, 64>}, {transform_indices = @transform_2, window_bounds = array<i64: 1, 64>}, {transform_indices = @transform_3, window_bounds = array<i64: 16, 64>}]} {
    %c0_i32 = arith.constant 0 : i32
    %0 = arith.cmpi eq, %arg2, %c0_i32 : i32
    %1 = arith.extui %0 : i1 to i32
    %c0_i32_0 = arith.constant 0 : i32
    %2 = arith.cmpi ne, %1, %c0_i32_0 : i32
    scf.if %2 {
      %cst_10 = arith.constant 0.000000e+00 : f32
      %12 = vector.broadcast %cst_10 : f32 to vector<16x64xf32>
      %c0_11 = arith.constant 0 : index
      %c0_12 = arith.constant 0 : index
      %13 = vector.load %arg7[%c0_11, %c0_12] : memref<16x64xf32, #tpu.memory_space<vmem>>, vector<16x64xf32>
      tpu.vector_store %arg7[%c0_11, %c0_12], %12 {strides = array<i32>} : memref<16x64xf32, #tpu.memory_space<vmem>>, vector<16x64xf32>,
    } else {
    }
    %c0 = arith.constant 0 : index
    %c0_1 = arith.constant 0 : index
    %3 = vector.load %arg7[%c0, %c0_1] : memref<16x64xf32, #tpu.memory_space<vmem>>, vector<16x64xf32>
    %c0_2 = arith.constant 0 : index
    %c0_3 = arith.constant 0 : index
    %4 = vector.load %arg3[%c0_2, %c0_3] : memref<16x32xf32, #tpu.memory_space<vmem>>, vector<16x32xf32>
    %c0_4 = arith.constant 0 : index
    %c0_5 = arith.constant 0 : index
    %5 = vector.load %arg4[%c0_4, %c0_5] : memref<32x64xf32, #tpu.memory_space<vmem>>, vector<32x64xf32>
    %cst = arith.constant dense<0.000000e+00> : vector<16x64xf32>
    %6 = tpu.matmul %4, %5, %cst {dimension_numbers = #tpu.dot_dimension_numbers<[1], [0], [0], [1], [0, 0, 1, 1], [], []>} : vector<16x32xf32>, vector<32x64xf32>, vector<16x64xf32> -> vector<16x64xf32>
    %7 = arith.addf %3, %6 : vector<16x64xf32>
    %c0_6 = arith.constant 0 : index
    %c0_7 = arith.constant 0 : index
    %8 = vector.load %arg7[%c0_6, %c0_7] : memref<16x64xf32, #tpu.memory_space<vmem>>, vector<16x64xf32>
    tpu.vector_store %arg7[%c0_6, %c0_7], %7 {strides = array<i32>} : memref<16x64xf32, #tpu.memory_space<vmem>>, vector<16x64xf32>,
    %c0_i32_8 = arith.constant 0 : i32
    %9 = arith.cmpi eq, %arg2, %c0_i32_8 : i32
    %10 = arith.extui %9 : i1 to i32
    %c0_i32_9 = arith.constant 0 : i32
    %11 = arith.cmpi ne, %10, %c0_i32_9 : i32
    scf.if %11 {
      %c0_10 = arith.constant 0 : index
      %c0_11 = arith.constant 0 : index
      %12 = vector.load %arg7[%c0_10, %c0_11] : memref<16x64xf32, #tpu.memory_space<vmem>>, vector<16x64xf32>
      %c0_12 = arith.constant 0 : index
      %c0_13 = arith.constant 0 : index
      %13 = vector.load %arg5[%c0_12, %c0_13] : memref<1x64xf32, #tpu.memory_space<vmem>>, vector<1x64xf32>
      %14 = vector.broadcast %13 : vector<1x64xf32> to vector<16x64xf32>
      %15 = arith.addf %12, %14 : vector<16x64xf32>
      %cst_14 = arith.constant 0.000000e+00 : f32
      %16 = vector.broadcast %cst_14 : f32 to vector<16x64xf32>
      %17 = arith.maximumf %15, %16 : vector<16x64xf32>
      %c0_15 = arith.constant 0 : index
      %c0_16 = arith.constant 0 : index
      %18 = vector.load %arg6[%c0_15, %c0_16] : memref<16x64xf32, #tpu.memory_space<vmem>>, vector<16x64xf32>
      tpu.vector_store %arg6[%c0_15, %c0_16], %17 {strides = array<i32>} : memref<16x64xf32, #tpu.memory_space<vmem>>, vector<16x64xf32>,
    } else {
    }
    return
  }
  func.func @transform_0(%arg0: i32, %arg1: i32, %arg2: i32) -> (i32, i32) {
    %c0_i32 = arith.constant 0 : i32
    return %arg0, %arg2 : i32, i32
  }
  func.func @transform_1(%arg0: i32, %arg1: i32, %arg2: i32) -> (i32, i32) {
    %c0_i32 = arith.constant 0 : i32
    return %arg2, %arg1 : i32, i32
  }
  func.func @transform_2(%arg0: i32, %arg1: i32, %arg2: i32) -> (i32, i32) {
    %c0_i32 = arith.constant 0 : i32
    %c0_i32_0 = arith.constant 0 : i32
    return %c0_i32, %arg1 : i32, i32
  }
  func.func @transform_3(%arg0: i32, %arg1: i32, %arg2: i32) -> (i32, i32) {
    %c0_i32 = arith.constant 0 : i32
    return %arg0, %arg1 : i32, i32
  }
}

module attributes {stable_mosaic.version = 11 : i64} {
  func.func @_linear_add_ln_kernel(%arg0: i32, %arg1: i32, %arg2: memref<16x32xf32, #tpu.memory_space<vmem>>, %arg3: memref<32x32xf32, #tpu.memory_space<vmem>>, %arg4: memref<1x32xf32, #tpu.memory_space<vmem>>, %arg5: memref<16x32xf32, #tpu.memory_space<vmem>>, %arg6: memref<1x32xf32, #tpu.memory_space<vmem>>, %arg7: memref<1x32xf32, #tpu.memory_space<vmem>>, %arg8: memref<16x32xf32, #tpu.memory_space<vmem>>, %arg9: memref<16x32xf32, #tpu.memory_space<vmem>>) attributes {dimension_semantics = [#tpu.dimension_semantics<parallel>, #tpu.dimension_semantics<arbitrary>], iteration_bounds = array<i64: 1, 1>, scalar_prefetch = 0 : i64, scratch_operands = 1 : i64, tpu.core_type = #tpu.core_type<tc>, window_params = [{transform_indices = @transform_0, window_bounds = array<i64: 16, 32>}, {transform_indices = @transform_1, window_bounds = array<i64: 32, 32>}, {pipeline_mode = #tpu.pipeline_mode<synchronous>, transform_indices = @transform_2, window_bounds = array<i64: 1, 32>}, {transform_indices = @transform_3, window_bounds = array<i64: 16, 32>}, {pipeline_mode = #tpu.pipeline_mode<synchronous>, transform_indices = @transform_4, window_bounds = array<i64: 1, 32>}, {pipeline_mode = #tpu.pipeline_mode<synchronous>, transform_indices = @transform_5, window_bounds = array<i64: 1, 32>}, {transform_indices = @transform_6, window_bounds = array<i64: 16, 32>}]} {
    %c0_i32 = arith.constant 0 : i32
    %0 = arith.cmpi eq, %arg1, %c0_i32 : i32
    %1 = arith.extui %0 : i1 to i32
    %c0_i32_0 = arith.constant 0 : i32
    %2 = arith.cmpi ne, %1, %c0_i32_0 : i32
    scf.if %2 {
      %cst_10 = arith.constant 0.000000e+00 : f32
      %12 = vector.broadcast %cst_10 : f32 to vector<16x32xf32>
      %c0_11 = arith.constant 0 : index
      %c0_12 = arith.constant 0 : index
      %13 = vector.load %arg9[%c0_11, %c0_12] : memref<16x32xf32, #tpu.memory_space<vmem>>, vector<16x32xf32>
      tpu.vector_store %arg9[%c0_11, %c0_12], %12 {strides = array<i32>} : memref<16x32xf32, #tpu.memory_space<vmem>>, vector<16x32xf32>,
    } else {
    }
    %c0 = arith.constant 0 : index
    %c0_1 = arith.constant 0 : index
    %3 = vector.load %arg9[%c0, %c0_1] : memref<16x32xf32, #tpu.memory_space<vmem>>, vector<16x32xf32>
    %c0_2 = arith.constant 0 : index
    %c0_3 = arith.constant 0 : index
    %4 = vector.load %arg2[%c0_2, %c0_3] : memref<16x32xf32, #tpu.memory_space<vmem>>, vector<16x32xf32>
    %c0_4 = arith.constant 0 : index
    %c0_5 = arith.constant 0 : index
    %5 = vector.load %arg3[%c0_4, %c0_5] : memref<32x32xf32, #tpu.memory_space<vmem>>, vector<32x32xf32>
    %cst = arith.constant dense<0.000000e+00> : vector<16x32xf32>
    %6 = tpu.matmul %4, %5, %cst {dimension_numbers = #tpu.dot_dimension_numbers<[1], [0], [0], [1], [0, 0, 1, 1], [], []>} : vector<16x32xf32>, vector<32x32xf32>, vector<16x32xf32> -> vector<16x32xf32>
    %7 = arith.addf %3, %6 : vector<16x32xf32>
    %c0_6 = arith.constant 0 : index
    %c0_7 = arith.constant 0 : index
    %8 = vector.load %arg9[%c0_6, %c0_7] : memref<16x32xf32, #tpu.memory_space<vmem>>, vector<16x32xf32>
    tpu.vector_store %arg9[%c0_6, %c0_7], %7 {strides = array<i32>} : memref<16x32xf32, #tpu.memory_space<vmem>>, vector<16x32xf32>,
    %c0_i32_8 = arith.constant 0 : i32
    %9 = arith.cmpi eq, %arg1, %c0_i32_8 : i32
    %10 = arith.extui %9 : i1 to i32
    %c0_i32_9 = arith.constant 0 : i32
    %11 = arith.cmpi ne, %10, %c0_i32_9 : i32
    scf.if %11 {
      %c0_10 = arith.constant 0 : index
      %c0_11 = arith.constant 0 : index
      %12 = vector.load %arg9[%c0_10, %c0_11] : memref<16x32xf32, #tpu.memory_space<vmem>>, vector<16x32xf32>
      %c0_12 = arith.constant 0 : index
      %c0_13 = arith.constant 0 : index
      %13 = vector.load %arg4[%c0_12, %c0_13] : memref<1x32xf32, #tpu.memory_space<vmem>>, vector<1x32xf32>
      %14 = vector.broadcast %13 : vector<1x32xf32> to vector<16x32xf32>
      %15 = arith.addf %12, %14 : vector<16x32xf32>
      %c0_14 = arith.constant 0 : index
      %c0_15 = arith.constant 0 : index
      %16 = vector.load %arg5[%c0_14, %c0_15] : memref<16x32xf32, #tpu.memory_space<vmem>>, vector<16x32xf32>
      %17 = arith.addf %15, %16 : vector<16x32xf32>
      %cst_16 = arith.constant dense<0.000000e+00> : vector<16xf32>
      %18 = vector.multi_reduction <add>, %17, %cst_16 [1] : vector<16x32xf32> to vector<16xf32>
      %19 = vector.shape_cast %18 : vector<16xf32> to vector<16x1xf32>
      %cst_17 = arith.constant 3.200000e+01 : f32
      %20 = vector.broadcast %cst_17 : f32 to vector<16x1xf32>
      %21 = arith.divf %19, %20 : vector<16x1xf32>
      %22 = vector.broadcast %21 : vector<16x1xf32> to vector<16x32xf32>
      %23 = arith.subf %17, %22 : vector<16x32xf32>
      %24 = arith.mulf %23, %23 : vector<16x32xf32>
      %cst_18 = arith.constant dense<0.000000e+00> : vector<16xf32>
      %25 = vector.multi_reduction <add>, %24, %cst_18 [1] : vector<16x32xf32> to vector<16xf32>
      %26 = vector.shape_cast %25 : vector<16xf32> to vector<16x1xf32>
      %cst_19 = arith.constant 3.200000e+01 : f32
      %27 = vector.broadcast %cst_19 : f32 to vector<16x1xf32>
      %28 = arith.divf %26, %27 : vector<16x1xf32>
      %cst_20 = arith.constant 9.99999997E-7 : f32
      %29 = vector.broadcast %cst_20 : f32 to vector<16x1xf32>
      %30 = arith.addf %28, %29 : vector<16x1xf32>
      %31 = math.rsqrt %30 : vector<16x1xf32>
      %32 = vector.broadcast %31 : vector<16x1xf32> to vector<16x32xf32>
      %33 = arith.mulf %23, %32 : vector<16x32xf32>
      %c0_21 = arith.constant 0 : index
      %c0_22 = arith.constant 0 : index
      %34 = vector.load %arg6[%c0_21, %c0_22] : memref<1x32xf32, #tpu.memory_space<vmem>>, vector<1x32xf32>
      %35 = vector.broadcast %34 : vector<1x32xf32> to vector<16x32xf32>
      %36 = arith.mulf %33, %35 : vector<16x32xf32>
      %c0_23 = arith.constant 0 : index
      %c0_24 = arith.constant 0 : index
      %37 = vector.load %arg7[%c0_23, %c0_24] : memref<1x32xf32, #tpu.memory_space<vmem>>, vector<1x32xf32>
      %38 = vector.broadcast %37 : vector<1x32xf32> to vector<16x32xf32>
      %39 = arith.addf %36, %38 : vector<16x32xf32>
      %c0_25 = arith.constant 0 : index
      %c0_26 = arith.constant 0 : index
      %40 = vector.load %arg8[%c0_25, %c0_26] : memref<16x32xf32, #tpu.memory_space<vmem>>, vector<16x32xf32>
      tpu.vector_store %arg8[%c0_25, %c0_26], %39 {strides = array<i32>} : memref<16x32xf32, #tpu.memory_space<vmem>>, vector<16x32xf32>,
    } else {
    }
    return
  }
  func.func @transform_0(%arg0: i32, %arg1: i32) -> (i32, i32) {
    %c0_i32 = arith.constant 0 : i32
    return %arg0, %arg1 : i32, i32
  }
  func.func @transform_1(%arg0: i32, %arg1: i32) -> (i32, i32) {
    %c0_i32 = arith.constant 0 : i32
    %c0_i32_0 = arith.constant 0 : i32
    return %arg1, %c0_i32 : i32, i32
  }
  func.func @transform_2(%arg0: i32, %arg1: i32) -> (i32, i32) {
    %c0_i32 = arith.constant 0 : i32
    %c0_i32_0 = arith.constant 0 : i32
    %c0_i32_1 = arith.constant 0 : i32
    return %c0_i32, %c0_i32_0 : i32, i32
  }
  func.func @transform_3(%arg0: i32, %arg1: i32) -> (i32, i32) {
    %c0_i32 = arith.constant 0 : i32
    %c0_i32_0 = arith.constant 0 : i32
    return %arg0, %c0_i32 : i32, i32
  }
  func.func @transform_4(%arg0: i32, %arg1: i32) -> (i32, i32) {
    %c0_i32 = arith.constant 0 : i32
    %c0_i32_0 = arith.constant 0 : i32
    %c0_i32_1 = arith.constant 0 : i32
    return %c0_i32, %c0_i32_0 : i32, i32
  }
  func.func @transform_5(%arg0: i32, %arg1: i32) -> (i32, i32) {
    %c0_i32 = arith.constant 0 : i32
    %c0_i32_0 = arith.constant 0 : i32
    %c0_i32_1 = arith.constant 0 : i32
    return %c0_i32, %c0_i32_0 : i32, i32
  }
  func.func @transform_6(%arg0: i32, %arg1: i32) -> (i32, i32) {
    %c0_i32 = arith.constant 0 : i32
    %c0_i32_0 = arith.constant 0 : i32
    return %arg0, %c0_i32 : i32, i32
  }
}

module attributes {stable_mosaic.version = 11 : i64} {
  func.func @_rel_attention_kernel(%arg0: i32, %arg1: memref<1x8x96xf32, #tpu.memory_space<vmem>>, %arg2: memref<8x8xf32, #tpu.memory_space<vmem>>, %arg3: memref<1x1x8xf32, #tpu.memory_space<vmem>>, %arg4: memref<1x8x32xf32, #tpu.memory_space<vmem>>) attributes {dimension_semantics = [#tpu.dimension_semantics<parallel>], iteration_bounds = array<i64: 2>, scalar_prefetch = 0 : i64, scratch_operands = 0 : i64, tpu.core_type = #tpu.core_type<tc>, window_params = [{transform_indices = @transform_0, window_bounds = array<i64: 1, 8, 96>}, {pipeline_mode = #tpu.pipeline_mode<synchronous>, transform_indices = @transform_1, window_bounds = array<i64: 8, 8>}, {transform_indices = @transform_2, window_bounds = array<i64: 1, 1, 8>}, {transform_indices = @transform_3, window_bounds = array<i64: 1, 8, 32>}]} {
    %c0 = arith.constant 0 : index
    %c0_0 = arith.constant 0 : index
    %c0_1 = arith.constant 0 : index
    %0 = vector.load %arg1[%c0, %c0_0, %c0_1] : memref<1x8x96xf32, #tpu.memory_space<vmem>>, vector<1x8x96xf32>
    %1 = vector.shape_cast %0 : vector<1x8x96xf32> to vector<8x96xf32>
    %c0_2 = arith.constant 0 : index
    %c0_3 = arith.constant 0 : index
    %2 = vector.load %arg2[%c0_2, %c0_3] : memref<8x8xf32, #tpu.memory_space<vmem>>, vector<8x8xf32>
    %c0_4 = arith.constant 0 : index
    %c0_5 = arith.constant 0 : index
    %c0_6 = arith.constant 0 : index
    %3 = vector.load %arg3[%c0_4, %c0_5, %c0_6] : memref<1x1x8xf32, #tpu.memory_space<vmem>>, vector<1x1x8xf32>
    %4 = vector.shape_cast %3 : vector<1x1x8xf32> to vector<1x8xf32>
    %5 = tpu.iota {dimensions = array<i32: 0>} : vector<8x8xi32>
    %6 = tpu.iota {dimensions = array<i32: 1>} : vector<8x8xi32>
    %7 = arith.cmpi sgt, %6, %5 : vector<8x8xi32>
    %cst = arith.constant 5.000000e-01 : f32
    %8 = vector.broadcast %cst : f32 to vector<1x8xf32>
    %9 = arith.cmpf ogt, %4, %8 : vector<1x8xf32>
    %10 = vector.broadcast %9 : vector<1x8xi1> to vector<8x8xi1>
    %11 = arith.ori %7, %10 : vector<8x8xi1>
    %cst_7 = arith.constant -1.000000e+30 : f32
    %cst_8 = arith.constant 0.000000e+00 : f32
    %12 = vector.broadcast %cst_7 : f32 to vector<8x8xf32>
    %13 = vector.broadcast %cst_8 : f32 to vector<8x8xf32>
    %14 = arith.select %11, %12, %13 : vector<8x8xi1>, vector<8x8xf32>
    %c7_i32 = arith.constant 7 : i32
    %15 = vector.broadcast %c7_i32 : i32 to vector<8x8xi32>
    %16 = arith.subi %15, %5 : vector<8x8xi32>
    %17 = arith.cmpi sge, %6, %16 : vector<8x8xi32>
    %18 = arith.extui %17 : vector<8x8xi1> to vector<8x8xi32>
    %19 = arith.sitofp %18 : vector<8x8xi32> to vector<8x8xf32>
    %20 = vector.extract_strided_slice %1 {offsets = [0, 0], sizes = [8, 8], strides = [1, 1]} : vector<8x96xf32> to vector<8x8xf32>
    %21 = vector.extract_strided_slice %1 {offsets = [0, 32], sizes = [8, 8], strides = [1, 1]} : vector<8x96xf32> to vector<8x8xf32>
    %22 = vector.extract_strided_slice %1 {offsets = [0, 64], sizes = [8, 8], strides = [1, 1]} : vector<8x96xf32> to vector<8x8xf32>
    %cst_9 = arith.constant dense<0.000000e+00> : vector<8x8xf32>
    %23 = tpu.matmul %20, %2, %cst_9 {dimension_numbers = #tpu.dot_dimension_numbers<[1], [1], [0], [0], [0, 0, 1, 0], [], []>} : vector<8x8xf32>, vector<8x8xf32>, vector<8x8xf32> -> vector<8x8xf32>
    %24 = arith.mulf %23, %19 : vector<8x8xf32>
    %25 = tpu.iota {dimensions = array<i32: 0>} : vector<8x1xi32>
    %c1_i32 = arith.constant 1 : i32
    %26 = vector.broadcast %c1_i32 : i32 to vector<8x1xi32>
    %27 = arith.addi %25, %26 : vector<8x1xi32>
    %c8_i32 = arith.constant 8 : i32
    %c0_i32 = arith.constant 0 : i32
    %28 = arith.cmpi eq, %c8_i32, %c0_i32 : i32
    %c1_i32_10 = arith.constant 1 : i32
    %29 = arith.select %28, %c1_i32_10, %c8_i32 : i32
    %30 = vector.broadcast %29 : i32 to vector<8x1xi32>
    %31 = arith.remsi %27, %30 : vector<8x1xi32>
    %c0_i32_11 = arith.constant 0 : i32
    %32 = vector.broadcast %c0_i32_11 : i32 to vector<8x1xi32>
    %33 = arith.cmpi ne, %31, %32 : vector<8x1xi32>
    %c0_i32_12 = arith.constant 0 : i32
    %34 = vector.broadcast %c0_i32_12 : i32 to vector<8x1xi32>
    %35 = arith.cmpi slt, %31, %34 : vector<8x1xi32>
    %c0_i32_13 = arith.constant 0 : i32
    %36 = arith.cmpi slt, %29, %c0_i32_13 : i32
    %37 = vector.broadcast %36 : i1 to vector<8x1xi1>
    %38 = vector.broadcast %37 : vector<8x1xi1> to vector<8x1xi1>
    %39 = arith.xori %35, %38 : vector<8x1xi1>
    %40 = arith.andi %39, %33 : vector<8x1xi1>
    %41 = vector.broadcast %29 : i32 to vector<8x1xi32>
    %42 = arith.addi %31, %41 : vector<8x1xi32>
    %43 = arith.select %40, %42, %31 : vector<8x1xi1>, vector<8x1xi32>
    %44 = vector.extract_strided_slice %24 {offsets = [0, 7], sizes = [8, 1], strides = [1, 1]} : vector<8x8xf32> to vector<8x1xf32>
    %45 = vector.extract_strided_slice %24 {offsets = [0, 0], sizes = [8, 7], strides = [1, 1]} : vector<8x8xf32> to vector<8x7xf32>
    %46 = tpu.concatenate %44, %45 in 1 : vector<8x1xf32>, vector<8x7xf32> -> vector<8x8xf32>
    %c1_i32_14 = arith.constant 1 : i32
    %47 = vector.broadcast %c1_i32_14 : i32 to vector<8x1xi32>
    %48 = arith.andi %43, %47 : vector<8x1xi32>
    %c0_i32_15 = arith.constant 0 : i32
    %49 = vector.broadcast %c0_i32_15 : i32 to vector<8x1xi32>
    %50 = arith.cmpi ne, %48, %49 : vector<8x1xi32>
    %51 = vector.shape_cast %50 : vector<8x1xi1> to vector<8x1xi1>
    %52 = vector.broadcast %51 : vector<8x1xi1> to vector<8x8xi1>
    %53 = arith.select %52, %46, %24 : vector<8x8xi1>, vector<8x8xf32>
    %54 = vector.extract_strided_slice %53 {offsets = [0, 6], sizes = [8, 2], strides = [1, 1]} : vector<8x8xf32> to vector<8x2xf32>
    %55 = vector.extract_strided_slice %53 {offsets = [0, 0], sizes = [8, 6], strides = [1, 1]} : vector<8x8xf32> to vector<8x6xf32>
    %56 = tpu.concatenate %54, %55 in 1 : vector<8x2xf32>, vector<8x6xf32> -> vector<8x8xf32>
    %c2_i32 = arith.constant 2 : i32
    %57 = vector.broadcast %c2_i32 : i32 to vector<8x1xi32>
    %58 = arith.andi %43, %57 : vector<8x1xi32>
    %c0_i32_16 = arith.constant 0 : i32
    %59 = vector.broadcast %c0_i32_16 : i32 to vector<8x1xi32>
    %60 = arith.cmpi ne, %58, %59 : vector<8x1xi32>
    %61 = vector.shape_cast %60 : vector<8x1xi1> to vector<8x1xi1>
    %62 = vector.broadcast %61 : vector<8x1xi1> to vector<8x8xi1>
    %63 = arith.select %62, %56, %53 : vector<8x8xi1>, vector<8x8xf32>
    %64 = vector.extract_strided_slice %63 {offsets = [0, 4], sizes = [8, 4], strides = [1, 1]} : vector<8x8xf32> to vector<8x4xf32>
    %65 = vector.extract_strided_slice %63 {offsets = [0, 0], sizes = [8, 4], strides = [1, 1]} : vector<8x8xf32> to vector<8x4xf32>
    %66 = tpu.concatenate %64, %65 in 1 : vector<8x4xf32>, vector<8x4xf32> -> vector<8x8xf32>
    %c4_i32 = arith.constant 4 : i32
    %67 = vector.broadcast %c4_i32 : i32 to vector<8x1xi32>
    %68 = arith.andi %43, %67 : vector<8x1xi32>
    %c0_i32_17 = arith.constant 0 : i32
    %69 = vector.broadcast %c0_i32_17 : i32 to vector<8x1xi32>
    %70 = arith.cmpi ne, %68, %69 : vector<8x1xi32>
    %71 = vector.shape_cast %70 : vector<8x1xi1> to vector<8x1xi1>
    %72 = vector.broadcast %71 : vector<8x1xi1> to vector<8x8xi1>
    %73 = arith.select %72, %66, %63 : vector<8x8xi1>, vector<8x8xf32>
    %cst_18 = arith.constant dense<0.000000e+00> : vector<8x8xf32>
    %74 = tpu.matmul %20, %21, %cst_18 {dimension_numbers = #tpu.dot_dimension_numbers<[1], [1], [0], [0], [0, 0, 1, 0], [], []>} : vector<8x8xf32>, vector<8x8xf32>, vector<8x8xf32> -> vector<8x8xf32>
    %75 = arith.addf %74, %73 : vector<8x8xf32>
    %cst_19 = arith.constant 0.353553385 : f32
    %76 = vector.broadcast %cst_19 : f32 to vector<8x8xf32>
    %77 = arith.mulf %75, %76 : vector<8x8xf32>
    %78 = arith.addf %77, %14 : vector<8x8xf32>
    %cst_20 = arith.constant dense<0xFF800000> : vector<8xf32>
    %79 = vector.multi_reduction <maximumf>, %78, %cst_20 [1] : vector<8x8xf32> to vector<8xf32>
    %80 = vector.shape_cast %79 : vector<8xf32> to vector<8x1xf32>
    %81 = vector.broadcast %80 : vector<8x1xf32> to vector<8x8xf32>
    %82 = arith.subf %78, %81 : vector<8x8xf32>
    %83 = math.exp %82 : vector<8x8xf32>
    %cst_21 = arith.constant dense<0.000000e+00> : vector<8xf32>
    %84 = vector.multi_reduction <add>, %83, %cst_21 [1] : vector<8x8xf32> to vector<8xf32>
    %85 = vector.shape_cast %84 : vector<8xf32> to vector<8x1xf32>
    %86 = tpu.reciprocal %85 : vector<8x1xf32> -> vector<8x1xf32>
    %87 = vector.broadcast %86 : vector<8x1xf32> to vector<8x8xf32>
    %88 = arith.mulf %83, %87 : vector<8x8xf32>
    %cst_22 = arith.constant dense<0.000000e+00> : vector<8x8xf32>
    %89 = tpu.matmul %88, %22, %cst_22 {dimension_numbers = #tpu.dot_dimension_numbers<[1], [0], [0], [1], [0, 0, 1, 1], [], []>} : vector<8x8xf32>, vector<8x8xf32>, vector<8x8xf32> -> vector<8x8xf32>
    %90 = vector.extract_strided_slice %1 {offsets = [0, 8], sizes = [8, 8], strides = [1, 1]} : vector<8x96xf32> to vector<8x8xf32>
    %91 = vector.extract_strided_slice %1 {offsets = [0, 40], sizes = [8, 8], strides = [1, 1]} : vector<8x96xf32> to vector<8x8xf32>
    %92 = vector.extract_strided_slice %1 {offsets = [0, 72], sizes = [8, 8], strides = [1, 1]} : vector<8x96xf32> to vector<8x8xf32>
    %cst_23 = arith.constant dense<0.000000e+00> : vector<8x8xf32>
    %93 = tpu.matmul %90, %2, %cst_23 {dimension_numbers = #tpu.dot_dimension_numbers<[1], [1], [0], [0], [0, 0, 1, 0], [], []>} : vector<8x8xf32>, vector<8x8xf32>, vector<8x8xf32> -> vector<8x8xf32>
    %94 = arith.mulf %93, %19 : vector<8x8xf32>
    %95 = tpu.iota {dimensions = array<i32: 0>} : vector<8x1xi32>
    %c1_i32_24 = arith.constant 1 : i32
    %96 = vector.broadcast %c1_i32_24 : i32 to vector<8x1xi32>
    %97 = arith.addi %95, %96 : vector<8x1xi32>
    %c8_i32_25 = arith.constant 8 : i32
    %c0_i32_26 = arith.constant 0 : i32
    %98 = arith.cmpi eq, %c8_i32_25, %c0_i32_26 : i32
    %c1_i32_27 = arith.constant 1 : i32
    %99 = arith.select %98, %c1_i32_27, %c8_i32_25 : i32
    %100 = vector.broadcast %99 : i32 to vector<8x1xi32>
    %101 = arith.remsi %97, %100 : vector<8x1xi32>
    %c0_i32_28 = arith.constant 0 : i32
    %102 = vector.broadcast %c0_i32_28 : i32 to vector<8x1xi32>
    %103 = arith.cmpi ne, %101, %102 : vector<8x1xi32>
    %c0_i32_29 = arith.constant 0 : i32
    %104 = vector.broadcast %c0_i32_29 : i32 to vector<8x1xi32>
    %105 = arith.cmpi slt, %101, %104 : vector<8x1xi32>
    %c0_i32_30 = arith.constant 0 : i32
    %106 = arith.cmpi slt, %99, %c0_i32_30 : i32
    %107 = vector.broadcast %106 : i1 to vector<8x1xi1>
    %108 = vector.broadcast %107 : vector<8x1xi1> to vector<8x1xi1>
    %109 = arith.xori %105, %108 : vector<8x1xi1>
    %110 = arith.andi %109, %103 : vector<8x1xi1>
    %111 = vector.broadcast %99 : i32 to vector<8x1xi32>
    %112 = arith.addi %101, %111 : vector<8x1xi32>
    %113 = arith.select %110, %112, %101 : vector<8x1xi1>, vector<8x1xi32>
    %114 = vector.extract_strided_slice %94 {offsets = [0, 7], sizes = [8, 1], strides = [1, 1]} : vector<8x8xf32> to vector<8x1xf32>
    %115 = vector.extract_strided_slice %94 {offsets = [0, 0], sizes = [8, 7], strides = [1, 1]} : vector<8x8xf32> to vector<8x7xf32>
    %116 = tpu.concatenate %114, %115 in 1 : vector<8x1xf32>, vector<8x7xf32> -> vector<8x8xf32>
    %c1_i32_31 = arith.constant 1 : i32
    %117 = vector.broadcast %c1_i32_31 : i32 to vector<8x1xi32>
    %118 = arith.andi %113, %117 : vector<8x1xi32>
    %c0_i32_32 = arith.constant 0 : i32
    %119 = vector.broadcast %c0_i32_32 : i32 to vector<8x1xi32>
    %120 = arith.cmpi ne, %118, %119 : vector<8x1xi32>
    %121 = vector.shape_cast %120 : vector<8x1xi1> to vector<8x1xi1>
    %122 = vector.broadcast %121 : vector<8x1xi1> to vector<8x8xi1>
    %123 = arith.select %122, %116, %94 : vector<8x8xi1>, vector<8x8xf32>
    %124 = vector.extract_strided_slice %123 {offsets = [0, 6], sizes = [8, 2], strides = [1, 1]} : vector<8x8xf32> to vector<8x2xf32>
    %125 = vector.extract_strided_slice %123 {offsets = [0, 0], sizes = [8, 6], strides = [1, 1]} : vector<8x8xf32> to vector<8x6xf32>
    %126 = tpu.concatenate %124, %125 in 1 : vector<8x2xf32>, vector<8x6xf32> -> vector<8x8xf32>
    %c2_i32_33 = arith.constant 2 : i32
    %127 = vector.broadcast %c2_i32_33 : i32 to vector<8x1xi32>
    %128 = arith.andi %113, %127 : vector<8x1xi32>
    %c0_i32_34 = arith.constant 0 : i32
    %129 = vector.broadcast %c0_i32_34 : i32 to vector<8x1xi32>
    %130 = arith.cmpi ne, %128, %129 : vector<8x1xi32>
    %131 = vector.shape_cast %130 : vector<8x1xi1> to vector<8x1xi1>
    %132 = vector.broadcast %131 : vector<8x1xi1> to vector<8x8xi1>
    %133 = arith.select %132, %126, %123 : vector<8x8xi1>, vector<8x8xf32>
    %134 = vector.extract_strided_slice %133 {offsets = [0, 4], sizes = [8, 4], strides = [1, 1]} : vector<8x8xf32> to vector<8x4xf32>
    %135 = vector.extract_strided_slice %133 {offsets = [0, 0], sizes = [8, 4], strides = [1, 1]} : vector<8x8xf32> to vector<8x4xf32>
    %136 = tpu.concatenate %134, %135 in 1 : vector<8x4xf32>, vector<8x4xf32> -> vector<8x8xf32>
    %c4_i32_35 = arith.constant 4 : i32
    %137 = vector.broadcast %c4_i32_35 : i32 to vector<8x1xi32>
    %138 = arith.andi %113, %137 : vector<8x1xi32>
    %c0_i32_36 = arith.constant 0 : i32
    %139 = vector.broadcast %c0_i32_36 : i32 to vector<8x1xi32>
    %140 = arith.cmpi ne, %138, %139 : vector<8x1xi32>
    %141 = vector.shape_cast %140 : vector<8x1xi1> to vector<8x1xi1>
    %142 = vector.broadcast %141 : vector<8x1xi1> to vector<8x8xi1>
    %143 = arith.select %142, %136, %133 : vector<8x8xi1>, vector<8x8xf32>
    %cst_37 = arith.constant dense<0.000000e+00> : vector<8x8xf32>
    %144 = tpu.matmul %90, %91, %cst_37 {dimension_numbers = #tpu.dot_dimension_numbers<[1], [1], [0], [0], [0, 0, 1, 0], [], []>} : vector<8x8xf32>, vector<8x8xf32>, vector<8x8xf32> -> vector<8x8xf32>
    %145 = arith.addf %144, %143 : vector<8x8xf32>
    %cst_38 = arith.constant 0.353553385 : f32
    %146 = vector.broadcast %cst_38 : f32 to vector<8x8xf32>
    %147 = arith.mulf %145, %146 : vector<8x8xf32>
    %148 = arith.addf %147, %14 : vector<8x8xf32>
    %cst_39 = arith.constant dense<0xFF800000> : vector<8xf32>
    %149 = vector.multi_reduction <maximumf>, %148, %cst_39 [1] : vector<8x8xf32> to vector<8xf32>
    %150 = vector.shape_cast %149 : vector<8xf32> to vector<8x1xf32>
    %151 = vector.broadcast %150 : vector<8x1xf32> to vector<8x8xf32>
    %152 = arith.subf %148, %151 : vector<8x8xf32>
    %153 = math.exp %152 : vector<8x8xf32>
    %cst_40 = arith.constant dense<0.000000e+00> : vector<8xf32>
    %154 = vector.multi_reduction <add>, %153, %cst_40 [1] : vector<8x8xf32> to vector<8xf32>
    %155 = vector.shape_cast %154 : vector<8xf32> to vector<8x1xf32>
    %156 = tpu.reciprocal %155 : vector<8x1xf32> -> vector<8x1xf32>
    %157 = vector.broadcast %156 : vector<8x1xf32> to vector<8x8xf32>
    %158 = arith.mulf %153, %157 : vector<8x8xf32>
    %cst_41 = arith.constant dense<0.000000e+00> : vector<8x8xf32>
    %159 = tpu.matmul %158, %92, %cst_41 {dimension_numbers = #tpu.dot_dimension_numbers<[1], [0], [0], [1], [0, 0, 1, 1], [], []>} : vector<8x8xf32>, vector<8x8xf32>, vector<8x8xf32> -> vector<8x8xf32>
    %160 = vector.extract_strided_slice %1 {offsets = [0, 16], sizes = [8, 8], strides = [1, 1]} : vector<8x96xf32> to vector<8x8xf32>
    %161 = vector.extract_strided_slice %1 {offsets = [0, 48], sizes = [8, 8], strides = [1, 1]} : vector<8x96xf32> to vector<8x8xf32>
    %162 = vector.extract_strided_slice %1 {offsets = [0, 80], sizes = [8, 8], strides = [1, 1]} : vector<8x96xf32> to vector<8x8xf32>
    %cst_42 = arith.constant dense<0.000000e+00> : vector<8x8xf32>
    %163 = tpu.matmul %160, %2, %cst_42 {dimension_numbers = #tpu.dot_dimension_numbers<[1], [1], [0], [0], [0, 0, 1, 0], [], []>} : vector<8x8xf32>, vector<8x8xf32>, vector<8x8xf32> -> vector<8x8xf32>
    %164 = arith.mulf %163, %19 : vector<8x8xf32>
    %165 = tpu.iota {dimensions = array<i32: 0>} : vector<8x1xi32>
    %c1_i32_43 = arith.constant 1 : i32
    %166 = vector.broadcast %c1_i32_43 : i32 to vector<8x1xi32>
    %167 = arith.addi %165, %166 : vector<8x1xi32>
    %c8_i32_44 = arith.constant 8 : i32
    %c0_i32_45 = arith.constant 0 : i32
    %168 = arith.cmpi eq, %c8_i32_44, %c0_i32_45 : i32
    %c1_i32_46 = arith.constant 1 : i32
    %169 = arith.select %168, %c1_i32_46, %c8_i32_44 : i32
    %170 = vector.broadcast %169 : i32 to vector<8x1xi32>
    %171 = arith.remsi %167, %170 : vector<8x1xi32>
    %c0_i32_47 = arith.constant 0 : i32
    %172 = vector.broadcast %c0_i32_47 : i32 to vector<8x1xi32>
    %173 = arith.cmpi ne, %171, %172 : vector<8x1xi32>
    %c0_i32_48 = arith.constant 0 : i32
    %174 = vector.broadcast %c0_i32_48 : i32 to vector<8x1xi32>
    %175 = arith.cmpi slt, %171, %174 : vector<8x1xi32>
    %c0_i32_49 = arith.constant 0 : i32
    %176 = arith.cmpi slt, %169, %c0_i32_49 : i32
    %177 = vector.broadcast %176 : i1 to vector<8x1xi1>
    %178 = vector.broadcast %177 : vector<8x1xi1> to vector<8x1xi1>
    %179 = arith.xori %175, %178 : vector<8x1xi1>
    %180 = arith.andi %179, %173 : vector<8x1xi1>
    %181 = vector.broadcast %169 : i32 to vector<8x1xi32>
    %182 = arith.addi %171, %181 : vector<8x1xi32>
    %183 = arith.select %180, %182, %171 : vector<8x1xi1>, vector<8x1xi32>
    %184 = vector.extract_strided_slice %164 {offsets = [0, 7], sizes = [8, 1], strides = [1, 1]} : vector<8x8xf32> to vector<8x1xf32>
    %185 = vector.extract_strided_slice %164 {offsets = [0, 0], sizes = [8, 7], strides = [1, 1]} : vector<8x8xf32> to vector<8x7xf32>
    %186 = tpu.concatenate %184, %185 in 1 : vector<8x1xf32>, vector<8x7xf32> -> vector<8x8xf32>
    %c1_i32_50 = arith.constant 1 : i32
    %187 = vector.broadcast %c1_i32_50 : i32 to vector<8x1xi32>
    %188 = arith.andi %183, %187 : vector<8x1xi32>
    %c0_i32_51 = arith.constant 0 : i32
    %189 = vector.broadcast %c0_i32_51 : i32 to vector<8x1xi32>
    %190 = arith.cmpi ne, %188, %189 : vector<8x1xi32>
    %191 = vector.shape_cast %190 : vector<8x1xi1> to vector<8x1xi1>
    %192 = vector.broadcast %191 : vector<8x1xi1> to vector<8x8xi1>
    %193 = arith.select %192, %186, %164 : vector<8x8xi1>, vector<8x8xf32>
    %194 = vector.extract_strided_slice %193 {offsets = [0, 6], sizes = [8, 2], strides = [1, 1]} : vector<8x8xf32> to vector<8x2xf32>
    %195 = vector.extract_strided_slice %193 {offsets = [0, 0], sizes = [8, 6], strides = [1, 1]} : vector<8x8xf32> to vector<8x6xf32>
    %196 = tpu.concatenate %194, %195 in 1 : vector<8x2xf32>, vector<8x6xf32> -> vector<8x8xf32>
    %c2_i32_52 = arith.constant 2 : i32
    %197 = vector.broadcast %c2_i32_52 : i32 to vector<8x1xi32>
    %198 = arith.andi %183, %197 : vector<8x1xi32>
    %c0_i32_53 = arith.constant 0 : i32
    %199 = vector.broadcast %c0_i32_53 : i32 to vector<8x1xi32>
    %200 = arith.cmpi ne, %198, %199 : vector<8x1xi32>
    %201 = vector.shape_cast %200 : vector<8x1xi1> to vector<8x1xi1>
    %202 = vector.broadcast %201 : vector<8x1xi1> to vector<8x8xi1>
    %203 = arith.select %202, %196, %193 : vector<8x8xi1>, vector<8x8xf32>
    %204 = vector.extract_strided_slice %203 {offsets = [0, 4], sizes = [8, 4], strides = [1, 1]} : vector<8x8xf32> to vector<8x4xf32>
    %205 = vector.extract_strided_slice %203 {offsets = [0, 0], sizes = [8, 4], strides = [1, 1]} : vector<8x8xf32> to vector<8x4xf32>
    %206 = tpu.concatenate %204, %205 in 1 : vector<8x4xf32>, vector<8x4xf32> -> vector<8x8xf32>
    %c4_i32_54 = arith.constant 4 : i32
    %207 = vector.broadcast %c4_i32_54 : i32 to vector<8x1xi32>
    %208 = arith.andi %183, %207 : vector<8x1xi32>
    %c0_i32_55 = arith.constant 0 : i32
    %209 = vector.broadcast %c0_i32_55 : i32 to vector<8x1xi32>
    %210 = arith.cmpi ne, %208, %209 : vector<8x1xi32>
    %211 = vector.shape_cast %210 : vector<8x1xi1> to vector<8x1xi1>
    %212 = vector.broadcast %211 : vector<8x1xi1> to vector<8x8xi1>
    %213 = arith.select %212, %206, %203 : vector<8x8xi1>, vector<8x8xf32>
    %cst_56 = arith.constant dense<0.000000e+00> : vector<8x8xf32>
    %214 = tpu.matmul %160, %161, %cst_56 {dimension_numbers = #tpu.dot_dimension_numbers<[1], [1], [0], [0], [0, 0, 1, 0], [], []>} : vector<8x8xf32>, vector<8x8xf32>, vector<8x8xf32> -> vector<8x8xf32>
    %215 = arith.addf %214, %213 : vector<8x8xf32>
    %cst_57 = arith.constant 0.353553385 : f32
    %216 = vector.broadcast %cst_57 : f32 to vector<8x8xf32>
    %217 = arith.mulf %215, %216 : vector<8x8xf32>
    %218 = arith.addf %217, %14 : vector<8x8xf32>
    %cst_58 = arith.constant dense<0xFF800000> : vector<8xf32>
    %219 = vector.multi_reduction <maximumf>, %218, %cst_58 [1] : vector<8x8xf32> to vector<8xf32>
    %220 = vector.shape_cast %219 : vector<8xf32> to vector<8x1xf32>
    %221 = vector.broadcast %220 : vector<8x1xf32> to vector<8x8xf32>
    %222 = arith.subf %218, %221 : vector<8x8xf32>
    %223 = math.exp %222 : vector<8x8xf32>
    %cst_59 = arith.constant dense<0.000000e+00> : vector<8xf32>
    %224 = vector.multi_reduction <add>, %223, %cst_59 [1] : vector<8x8xf32> to vector<8xf32>
    %225 = vector.shape_cast %224 : vector<8xf32> to vector<8x1xf32>
    %226 = tpu.reciprocal %225 : vector<8x1xf32> -> vector<8x1xf32>
    %227 = vector.broadcast %226 : vector<8x1xf32> to vector<8x8xf32>
    %228 = arith.mulf %223, %227 : vector<8x8xf32>
    %cst_60 = arith.constant dense<0.000000e+00> : vector<8x8xf32>
    %229 = tpu.matmul %228, %162, %cst_60 {dimension_numbers = #tpu.dot_dimension_numbers<[1], [0], [0], [1], [0, 0, 1, 1], [], []>} : vector<8x8xf32>, vector<8x8xf32>, vector<8x8xf32> -> vector<8x8xf32>
    %230 = vector.extract_strided_slice %1 {offsets = [0, 24], sizes = [8, 8], strides = [1, 1]} : vector<8x96xf32> to vector<8x8xf32>
    %231 = vector.extract_strided_slice %1 {offsets = [0, 56], sizes = [8, 8], strides = [1, 1]} : vector<8x96xf32> to vector<8x8xf32>
    %232 = vector.extract_strided_slice %1 {offsets = [0, 88], sizes = [8, 8], strides = [1, 1]} : vector<8x96xf32> to vector<8x8xf32>
    %cst_61 = arith.constant dense<0.000000e+00> : vector<8x8xf32>
    %233 = tpu.matmul %230, %2, %cst_61 {dimension_numbers = #tpu.dot_dimension_numbers<[1], [1], [0], [0], [0, 0, 1, 0], [], []>} : vector<8x8xf32>, vector<8x8xf32>, vector<8x8xf32> -> vector<8x8xf32>
    %234 = arith.mulf %233, %19 : vector<8x8xf32>
    %235 = tpu.iota {dimensions = array<i32: 0>} : vector<8x1xi32>
    %c1_i32_62 = arith.constant 1 : i32
    %236 = vector.broadcast %c1_i32_62 : i32 to vector<8x1xi32>
    %237 = arith.addi %235, %236 : vector<8x1xi32>
    %c8_i32_63 = arith.constant 8 : i32
    %c0_i32_64 = arith.constant 0 : i32
    %238 = arith.cmpi eq, %c8_i32_63, %c0_i32_64 : i32
    %c1_i32_65 = arith.constant 1 : i32
    %239 = arith.select %238, %c1_i32_65, %c8_i32_63 : i32
    %240 = vector.broadcast %239 : i32 to vector<8x1xi32>
    %241 = arith.remsi %237, %240 : vector<8x1xi32>
    %c0_i32_66 = arith.constant 0 : i32
    %242 = vector.broadcast %c0_i32_66 : i32 to vector<8x1xi32>
    %243 = arith.cmpi ne, %241, %242 : vector<8x1xi32>
    %c0_i32_67 = arith.constant 0 : i32
    %244 = vector.broadcast %c0_i32_67 : i32 to vector<8x1xi32>
    %245 = arith.cmpi slt, %241, %244 : vector<8x1xi32>
    %c0_i32_68 = arith.constant 0 : i32
    %246 = arith.cmpi slt, %239, %c0_i32_68 : i32
    %247 = vector.broadcast %246 : i1 to vector<8x1xi1>
    %248 = vector.broadcast %247 : vector<8x1xi1> to vector<8x1xi1>
    %249 = arith.xori %245, %248 : vector<8x1xi1>
    %250 = arith.andi %249, %243 : vector<8x1xi1>
    %251 = vector.broadcast %239 : i32 to vector<8x1xi32>
    %252 = arith.addi %241, %251 : vector<8x1xi32>
    %253 = arith.select %250, %252, %241 : vector<8x1xi1>, vector<8x1xi32>
    %254 = vector.extract_strided_slice %234 {offsets = [0, 7], sizes = [8, 1], strides = [1, 1]} : vector<8x8xf32> to vector<8x1xf32>
    %255 = vector.extract_strided_slice %234 {offsets = [0, 0], sizes = [8, 7], strides = [1, 1]} : vector<8x8xf32> to vector<8x7xf32>
    %256 = tpu.concatenate %254, %255 in 1 : vector<8x1xf32>, vector<8x7xf32> -> vector<8x8xf32>
    %c1_i32_69 = arith.constant 1 : i32
    %257 = vector.broadcast %c1_i32_69 : i32 to vector<8x1xi32>
    %258 = arith.andi %253, %257 : vector<8x1xi32>
    %c0_i32_70 = arith.constant 0 : i32
    %259 = vector.broadcast %c0_i32_70 : i32 to vector<8x1xi32>
    %260 = arith.cmpi ne, %258, %259 : vector<8x1xi32>
    %261 = vector.shape_cast %260 : vector<8x1xi1> to vector<8x1xi1>
    %262 = vector.broadcast %261 : vector<8x1xi1> to vector<8x8xi1>
    %263 = arith.select %262, %256, %234 : vector<8x8xi1>, vector<8x8xf32>
    %264 = vector.extract_strided_slice %263 {offsets = [0, 6], sizes = [8, 2], strides = [1, 1]} : vector<8x8xf32> to vector<8x2xf32>
    %265 = vector.extract_strided_slice %263 {offsets = [0, 0], sizes = [8, 6], strides = [1, 1]} : vector<8x8xf32> to vector<8x6xf32>
    %266 = tpu.concatenate %264, %265 in 1 : vector<8x2xf32>, vector<8x6xf32> -> vector<8x8xf32>
    %c2_i32_71 = arith.constant 2 : i32
    %267 = vector.broadcast %c2_i32_71 : i32 to vector<8x1xi32>
    %268 = arith.andi %253, %267 : vector<8x1xi32>
    %c0_i32_72 = arith.constant 0 : i32
    %269 = vector.broadcast %c0_i32_72 : i32 to vector<8x1xi32>
    %270 = arith.cmpi ne, %268, %269 : vector<8x1xi32>
    %271 = vector.shape_cast %270 : vector<8x1xi1> to vector<8x1xi1>
    %272 = vector.broadcast %271 : vector<8x1xi1> to vector<8x8xi1>
    %273 = arith.select %272, %266, %263 : vector<8x8xi1>, vector<8x8xf32>
    %274 = vector.extract_strided_slice %273 {offsets = [0, 4], sizes = [8, 4], strides = [1, 1]} : vector<8x8xf32> to vector<8x4xf32>
    %275 = vector.extract_strided_slice %273 {offsets = [0, 0], sizes = [8, 4], strides = [1, 1]} : vector<8x8xf32> to vector<8x4xf32>
    %276 = tpu.concatenate %274, %275 in 1 : vector<8x4xf32>, vector<8x4xf32> -> vector<8x8xf32>
    %c4_i32_73 = arith.constant 4 : i32
    %277 = vector.broadcast %c4_i32_73 : i32 to vector<8x1xi32>
    %278 = arith.andi %253, %277 : vector<8x1xi32>
    %c0_i32_74 = arith.constant 0 : i32
    %279 = vector.broadcast %c0_i32_74 : i32 to vector<8x1xi32>
    %280 = arith.cmpi ne, %278, %279 : vector<8x1xi32>
    %281 = vector.shape_cast %280 : vector<8x1xi1> to vector<8x1xi1>
    %282 = vector.broadcast %281 : vector<8x1xi1> to vector<8x8xi1>
    %283 = arith.select %282, %276, %273 : vector<8x8xi1>, vector<8x8xf32>
    %cst_75 = arith.constant dense<0.000000e+00> : vector<8x8xf32>
    %284 = tpu.matmul %230, %231, %cst_75 {dimension_numbers = #tpu.dot_dimension_numbers<[1], [1], [0], [0], [0, 0, 1, 0], [], []>} : vector<8x8xf32>, vector<8x8xf32>, vector<8x8xf32> -> vector<8x8xf32>
    %285 = arith.addf %284, %283 : vector<8x8xf32>
    %cst_76 = arith.constant 0.353553385 : f32
    %286 = vector.broadcast %cst_76 : f32 to vector<8x8xf32>
    %287 = arith.mulf %285, %286 : vector<8x8xf32>
    %288 = arith.addf %287, %14 : vector<8x8xf32>
    %cst_77 = arith.constant dense<0xFF800000> : vector<8xf32>
    %289 = vector.multi_reduction <maximumf>, %288, %cst_77 [1] : vector<8x8xf32> to vector<8xf32>
    %290 = vector.shape_cast %289 : vector<8xf32> to vector<8x1xf32>
    %291 = vector.broadcast %290 : vector<8x1xf32> to vector<8x8xf32>
    %292 = arith.subf %288, %291 : vector<8x8xf32>
    %293 = math.exp %292 : vector<8x8xf32>
    %cst_78 = arith.constant dense<0.000000e+00> : vector<8xf32>
    %294 = vector.multi_reduction <add>, %293, %cst_78 [1] : vector<8x8xf32> to vector<8xf32>
    %295 = vector.shape_cast %294 : vector<8xf32> to vector<8x1xf32>
    %296 = tpu.reciprocal %295 : vector<8x1xf32> -> vector<8x1xf32>
    %297 = vector.broadcast %296 : vector<8x1xf32> to vector<8x8xf32>
    %298 = arith.mulf %293, %297 : vector<8x8xf32>
    %cst_79 = arith.constant dense<0.000000e+00> : vector<8x8xf32>
    %299 = tpu.matmul %298, %232, %cst_79 {dimension_numbers = #tpu.dot_dimension_numbers<[1], [0], [0], [1], [0, 0, 1, 1], [], []>} : vector<8x8xf32>, vector<8x8xf32>, vector<8x8xf32> -> vector<8x8xf32>
    %300 = tpu.concatenate %89, %159, %229, %299 in 1 : vector<8x8xf32>, vector<8x8xf32>, vector<8x8xf32>, vector<8x8xf32> -> vector<8x32xf32>
    %c0_80 = arith.constant 0 : index
    %c0_81 = arith.constant 0 : index
    %c0_82 = arith.constant 0 : index
    %301 = vector.load %arg4[%c0_80, %c0_81, %c0_82] : memref<1x8x32xf32, #tpu.memory_space<vmem>>, vector<1x8x32xf32>
    %302 = vector.shape_cast %301 : vector<1x8x32xf32> to vector<8x32xf32>
    %303 = vector.shape_cast %300 : vector<8x32xf32> to vector<1x8x32xf32>
    tpu.vector_store %arg4[%c0_80, %c0_81, %c0_82], %303 {strides = array<i32>} : memref<1x8x32xf32, #tpu.memory_space<vmem>>, vector<1x8x32xf32>,
    return
  }
  func.func @transform_0(%arg0: i32) -> (i32, i32, i32) {
    %c0_i32 = arith.constant 0 : i32
    %c0_i32_0 = arith.constant 0 : i32
    %c0_i32_1 = arith.constant 0 : i32
    return %arg0, %c0_i32, %c0_i32_0 : i32, i32, i32
  }
  func.func @transform_1(%arg0: i32) -> (i32, i32) {
    %c0_i32 = arith.constant 0 : i32
    %c0_i32_0 = arith.constant 0 : i32
    %c0_i32_1 = arith.constant 0 : i32
    return %c0_i32, %c0_i32_0 : i32, i32
  }
  func.func @transform_2(%arg0: i32) -> (i32, i32, i32) {
    %c0_i32 = arith.constant 0 : i32
    %c0_i32_0 = arith.constant 0 : i32
    %c0_i32_1 = arith.constant 0 : i32
    return %arg0, %c0_i32, %c0_i32_0 : i32, i32, i32
  }
  func.func @transform_3(%arg0: i32) -> (i32, i32, i32) {
    %c0_i32 = arith.constant 0 : i32
    %c0_i32_0 = arith.constant 0 : i32
    %c0_i32_1 = arith.constant 0 : i32
    return %arg0, %c0_i32, %c0_i32_0 : i32, i32, i32
  }
}

module attributes {stable_mosaic.version = 11 : i64} {
  func.func @_linear_add_ln_kernel(%arg0: i32, %arg1: i32, %arg2: memref<16x64xf32, #tpu.memory_space<vmem>>, %arg3: memref<64x32xf32, #tpu.memory_space<vmem>>, %arg4: memref<1x32xf32, #tpu.memory_space<vmem>>, %arg5: memref<16x32xf32, #tpu.memory_space<vmem>>, %arg6: memref<1x32xf32, #tpu.memory_space<vmem>>, %arg7: memref<1x32xf32, #tpu.memory_space<vmem>>, %arg8: memref<16x32xf32, #tpu.memory_space<vmem>>, %arg9: memref<16x32xf32, #tpu.memory_space<vmem>>) attributes {dimension_semantics = [#tpu.dimension_semantics<parallel>, #tpu.dimension_semantics<arbitrary>], iteration_bounds = array<i64: 1, 1>, scalar_prefetch = 0 : i64, scratch_operands = 1 : i64, tpu.core_type = #tpu.core_type<tc>, window_params = [{transform_indices = @transform_0, window_bounds = array<i64: 16, 64>}, {transform_indices = @transform_1, window_bounds = array<i64: 64, 32>}, {pipeline_mode = #tpu.pipeline_mode<synchronous>, transform_indices = @transform_2, window_bounds = array<i64: 1, 32>}, {transform_indices = @transform_3, window_bounds = array<i64: 16, 32>}, {pipeline_mode = #tpu.pipeline_mode<synchronous>, transform_indices = @transform_4, window_bounds = array<i64: 1, 32>}, {pipeline_mode = #tpu.pipeline_mode<synchronous>, transform_indices = @transform_5, window_bounds = array<i64: 1, 32>}, {transform_indices = @transform_6, window_bounds = array<i64: 16, 32>}]} {
    %c0_i32 = arith.constant 0 : i32
    %0 = arith.cmpi eq, %arg1, %c0_i32 : i32
    %1 = arith.extui %0 : i1 to i32
    %c0_i32_0 = arith.constant 0 : i32
    %2 = arith.cmpi ne, %1, %c0_i32_0 : i32
    scf.if %2 {
      %cst_10 = arith.constant 0.000000e+00 : f32
      %12 = vector.broadcast %cst_10 : f32 to vector<16x32xf32>
      %c0_11 = arith.constant 0 : index
      %c0_12 = arith.constant 0 : index
      %13 = vector.load %arg9[%c0_11, %c0_12] : memref<16x32xf32, #tpu.memory_space<vmem>>, vector<16x32xf32>
      tpu.vector_store %arg9[%c0_11, %c0_12], %12 {strides = array<i32>} : memref<16x32xf32, #tpu.memory_space<vmem>>, vector<16x32xf32>,
    } else {
    }
    %c0 = arith.constant 0 : index
    %c0_1 = arith.constant 0 : index
    %3 = vector.load %arg9[%c0, %c0_1] : memref<16x32xf32, #tpu.memory_space<vmem>>, vector<16x32xf32>
    %c0_2 = arith.constant 0 : index
    %c0_3 = arith.constant 0 : index
    %4 = vector.load %arg2[%c0_2, %c0_3] : memref<16x64xf32, #tpu.memory_space<vmem>>, vector<16x64xf32>
    %c0_4 = arith.constant 0 : index
    %c0_5 = arith.constant 0 : index
    %5 = vector.load %arg3[%c0_4, %c0_5] : memref<64x32xf32, #tpu.memory_space<vmem>>, vector<64x32xf32>
    %cst = arith.constant dense<0.000000e+00> : vector<16x32xf32>
    %6 = tpu.matmul %4, %5, %cst {dimension_numbers = #tpu.dot_dimension_numbers<[1], [0], [0], [1], [0, 0, 1, 1], [], []>} : vector<16x64xf32>, vector<64x32xf32>, vector<16x32xf32> -> vector<16x32xf32>
    %7 = arith.addf %3, %6 : vector<16x32xf32>
    %c0_6 = arith.constant 0 : index
    %c0_7 = arith.constant 0 : index
    %8 = vector.load %arg9[%c0_6, %c0_7] : memref<16x32xf32, #tpu.memory_space<vmem>>, vector<16x32xf32>
    tpu.vector_store %arg9[%c0_6, %c0_7], %7 {strides = array<i32>} : memref<16x32xf32, #tpu.memory_space<vmem>>, vector<16x32xf32>,
    %c0_i32_8 = arith.constant 0 : i32
    %9 = arith.cmpi eq, %arg1, %c0_i32_8 : i32
    %10 = arith.extui %9 : i1 to i32
    %c0_i32_9 = arith.constant 0 : i32
    %11 = arith.cmpi ne, %10, %c0_i32_9 : i32
    scf.if %11 {
      %c0_10 = arith.constant 0 : index
      %c0_11 = arith.constant 0 : index
      %12 = vector.load %arg9[%c0_10, %c0_11] : memref<16x32xf32, #tpu.memory_space<vmem>>, vector<16x32xf32>
      %c0_12 = arith.constant 0 : index
      %c0_13 = arith.constant 0 : index
      %13 = vector.load %arg4[%c0_12, %c0_13] : memref<1x32xf32, #tpu.memory_space<vmem>>, vector<1x32xf32>
      %14 = vector.broadcast %13 : vector<1x32xf32> to vector<16x32xf32>
      %15 = arith.addf %12, %14 : vector<16x32xf32>
      %c0_14 = arith.constant 0 : index
      %c0_15 = arith.constant 0 : index
      %16 = vector.load %arg5[%c0_14, %c0_15] : memref<16x32xf32, #tpu.memory_space<vmem>>, vector<16x32xf32>
      %17 = arith.addf %15, %16 : vector<16x32xf32>
      %cst_16 = arith.constant dense<0.000000e+00> : vector<16xf32>
      %18 = vector.multi_reduction <add>, %17, %cst_16 [1] : vector<16x32xf32> to vector<16xf32>
      %19 = vector.shape_cast %18 : vector<16xf32> to vector<16x1xf32>
      %cst_17 = arith.constant 3.200000e+01 : f32
      %20 = vector.broadcast %cst_17 : f32 to vector<16x1xf32>
      %21 = arith.divf %19, %20 : vector<16x1xf32>
      %22 = vector.broadcast %21 : vector<16x1xf32> to vector<16x32xf32>
      %23 = arith.subf %17, %22 : vector<16x32xf32>
      %24 = arith.mulf %23, %23 : vector<16x32xf32>
      %cst_18 = arith.constant dense<0.000000e+00> : vector<16xf32>
      %25 = vector.multi_reduction <add>, %24, %cst_18 [1] : vector<16x32xf32> to vector<16xf32>
      %26 = vector.shape_cast %25 : vector<16xf32> to vector<16x1xf32>
      %cst_19 = arith.constant 3.200000e+01 : f32
      %27 = vector.broadcast %cst_19 : f32 to vector<16x1xf32>
      %28 = arith.divf %26, %27 : vector<16x1xf32>
      %cst_20 = arith.constant 9.99999997E-7 : f32
      %29 = vector.broadcast %cst_20 : f32 to vector<16x1xf32>
      %30 = arith.addf %28, %29 : vector<16x1xf32>
      %31 = math.rsqrt %30 : vector<16x1xf32>
      %32 = vector.broadcast %31 : vector<16x1xf32> to vector<16x32xf32>
      %33 = arith.mulf %23, %32 : vector<16x32xf32>
      %c0_21 = arith.constant 0 : index
      %c0_22 = arith.constant 0 : index
      %34 = vector.load %arg6[%c0_21, %c0_22] : memref<1x32xf32, #tpu.memory_space<vmem>>, vector<1x32xf32>
      %35 = vector.broadcast %34 : vector<1x32xf32> to vector<16x32xf32>
      %36 = arith.mulf %33, %35 : vector<16x32xf32>
      %c0_23 = arith.constant 0 : index
      %c0_24 = arith.constant 0 : index
      %37 = vector.load %arg7[%c0_23, %c0_24] : memref<1x32xf32, #tpu.memory_space<vmem>>, vector<1x32xf32>
      %38 = vector.broadcast %37 : vector<1x32xf32> to vector<16x32xf32>
      %39 = arith.addf %36, %38 : vector<16x32xf32>
      %c0_25 = arith.constant 0 : index
      %c0_26 = arith.constant 0 : index
      %40 = vector.load %arg8[%c0_25, %c0_26] : memref<16x32xf32, #tpu.memory_space<vmem>>, vector<16x32xf32>
      tpu.vector_store %arg8[%c0_25, %c0_26], %39 {strides = array<i32>} : memref<16x32xf32, #tpu.memory_space<vmem>>, vector<16x32xf32>,
    } else {
    }
    return
  }
  func.func @transform_0(%arg0: i32, %arg1: i32) -> (i32, i32) {
    %c0_i32 = arith.constant 0 : i32
    return %arg0, %arg1 : i32, i32
  }
  func.func @transform_1(%arg0: i32, %arg1: i32) -> (i32, i32) {
    %c0_i32 = arith.constant 0 : i32
    %c0_i32_0 = arith.constant 0 : i32
    return %arg1, %c0_i32 : i32, i32
  }
  func.func @transform_2(%arg0: i32, %arg1: i32) -> (i32, i32) {
    %c0_i32 = arith.constant 0 : i32
    %c0_i32_0 = arith.constant 0 : i32
    %c0_i32_1 = arith.constant 0 : i32
    return %c0_i32, %c0_i32_0 : i32, i32
  }
  func.func @transform_3(%arg0: i32, %arg1: i32) -> (i32, i32) {
    %c0_i32 = arith.constant 0 : i32
    %c0_i32_0 = arith.constant 0 : i32
    return %arg0, %c0_i32 : i32, i32
  }
  func.func @transform_4(%arg0: i32, %arg1: i32) -> (i32, i32) {
    %c0_i32 = arith.constant 0 : i32
    %c0_i32_0 = arith.constant 0 : i32
    %c0_i32_1 = arith.constant 0 : i32
    return %c0_i32, %c0_i32_0 : i32, i32
  }
  func.func @transform_5(%arg0: i32, %arg1: i32) -> (i32, i32) {
    %c0_i32 = arith.constant 0 : i32
    %c0_i32_0 = arith.constant 0 : i32
    %c0_i32_1 = arith.constant 0 : i32
    return %c0_i32, %c0_i32_0 : i32, i32
  }
  func.func @transform_6(%arg0: i32, %arg1: i32) -> (i32, i32) {
    %c0_i32 = arith.constant 0 : i32
    %c0_i32_0 = arith.constant 0 : i32
    return %arg0, %c0_i32 : i32, i32
  }
}

module attributes {stable_mosaic.version = 11 : i64} {
  func.func @_linear_kernel(%arg0: i32, %arg1: i32, %arg2: i32, %arg3: memref<16x32xf32, #tpu.memory_space<vmem>>, %arg4: memref<32x40xf32, #tpu.memory_space<vmem>>, %arg5: memref<1x40xf32, #tpu.memory_space<vmem>>, %arg6: memref<16x40xf32, #tpu.memory_space<vmem>>, %arg7: memref<16x40xf32, #tpu.memory_space<vmem>>) attributes {dimension_semantics = [#tpu.dimension_semantics<parallel>, #tpu.dimension_semantics<parallel>, #tpu.dimension_semantics<arbitrary>], iteration_bounds = array<i64: 1, 1, 1>, scalar_prefetch = 0 : i64, scratch_operands = 1 : i64, tpu.core_type = #tpu.core_type<tc>, window_params = [{transform_indices = @transform_0, window_bounds = array<i64: 16, 32>}, {transform_indices = @transform_1, window_bounds = array<i64: 32, 40>}, {transform_indices = @transform_2, window_bounds = array<i64: 1, 40>}, {transform_indices = @transform_3, window_bounds = array<i64: 16, 40>}]} {
    %c0_i32 = arith.constant 0 : i32
    %0 = arith.cmpi eq, %arg2, %c0_i32 : i32
    %1 = arith.extui %0 : i1 to i32
    %c0_i32_0 = arith.constant 0 : i32
    %2 = arith.cmpi ne, %1, %c0_i32_0 : i32
    scf.if %2 {
      %cst_10 = arith.constant 0.000000e+00 : f32
      %12 = vector.broadcast %cst_10 : f32 to vector<16x40xf32>
      %c0_11 = arith.constant 0 : index
      %c0_12 = arith.constant 0 : index
      %13 = vector.load %arg7[%c0_11, %c0_12] : memref<16x40xf32, #tpu.memory_space<vmem>>, vector<16x40xf32>
      tpu.vector_store %arg7[%c0_11, %c0_12], %12 {strides = array<i32>} : memref<16x40xf32, #tpu.memory_space<vmem>>, vector<16x40xf32>,
    } else {
    }
    %c0 = arith.constant 0 : index
    %c0_1 = arith.constant 0 : index
    %3 = vector.load %arg7[%c0, %c0_1] : memref<16x40xf32, #tpu.memory_space<vmem>>, vector<16x40xf32>
    %c0_2 = arith.constant 0 : index
    %c0_3 = arith.constant 0 : index
    %4 = vector.load %arg3[%c0_2, %c0_3] : memref<16x32xf32, #tpu.memory_space<vmem>>, vector<16x32xf32>
    %c0_4 = arith.constant 0 : index
    %c0_5 = arith.constant 0 : index
    %5 = vector.load %arg4[%c0_4, %c0_5] : memref<32x40xf32, #tpu.memory_space<vmem>>, vector<32x40xf32>
    %cst = arith.constant dense<0.000000e+00> : vector<16x40xf32>
    %6 = tpu.matmul %4, %5, %cst {dimension_numbers = #tpu.dot_dimension_numbers<[1], [0], [0], [1], [0, 0, 1, 1], [], []>} : vector<16x32xf32>, vector<32x40xf32>, vector<16x40xf32> -> vector<16x40xf32>
    %7 = arith.addf %3, %6 : vector<16x40xf32>
    %c0_6 = arith.constant 0 : index
    %c0_7 = arith.constant 0 : index
    %8 = vector.load %arg7[%c0_6, %c0_7] : memref<16x40xf32, #tpu.memory_space<vmem>>, vector<16x40xf32>
    tpu.vector_store %arg7[%c0_6, %c0_7], %7 {strides = array<i32>} : memref<16x40xf32, #tpu.memory_space<vmem>>, vector<16x40xf32>,
    %c0_i32_8 = arith.constant 0 : i32
    %9 = arith.cmpi eq, %arg2, %c0_i32_8 : i32
    %10 = arith.extui %9 : i1 to i32
    %c0_i32_9 = arith.constant 0 : i32
    %11 = arith.cmpi ne, %10, %c0_i32_9 : i32
    scf.if %11 {
      %c0_10 = arith.constant 0 : index
      %c0_11 = arith.constant 0 : index
      %12 = vector.load %arg7[%c0_10, %c0_11] : memref<16x40xf32, #tpu.memory_space<vmem>>, vector<16x40xf32>
      %c0_12 = arith.constant 0 : index
      %c0_13 = arith.constant 0 : index
      %13 = vector.load %arg5[%c0_12, %c0_13] : memref<1x40xf32, #tpu.memory_space<vmem>>, vector<1x40xf32>
      %14 = vector.broadcast %13 : vector<1x40xf32> to vector<16x40xf32>
      %15 = arith.addf %12, %14 : vector<16x40xf32>
      %c0_14 = arith.constant 0 : index
      %c0_15 = arith.constant 0 : index
      %16 = vector.load %arg6[%c0_14, %c0_15] : memref<16x40xf32, #tpu.memory_space<vmem>>, vector<16x40xf32>
      tpu.vector_store %arg6[%c0_14, %c0_15], %15 {strides = array<i32>} : memref<16x40xf32, #tpu.memory_space<vmem>>, vector<16x40xf32>,
    } else {
    }
    return
  }
  func.func @transform_0(%arg0: i32, %arg1: i32, %arg2: i32) -> (i32, i32) {
    %c0_i32 = arith.constant 0 : i32
    return %arg0, %arg2 : i32, i32
  }
  func.func @transform_1(%arg0: i32, %arg1: i32, %arg2: i32) -> (i32, i32) {
    %c0_i32 = arith.constant 0 : i32
    return %arg2, %arg1 : i32, i32
  }
  func.func @transform_2(%arg0: i32, %arg1: i32, %arg2: i32) -> (i32, i32) {
    %c0_i32 = arith.constant 0 : i32
    %c0_i32_0 = arith.constant 0 : i32
    return %c0_i32, %arg1 : i32, i32
  }
  func.func @transform_3(%arg0: i32, %arg1: i32, %arg2: i32) -> (i32, i32) {
    %c0_i32 = arith.constant 0 : i32
    return %arg0, %arg1 : i32, i32
  }
}

</mosaic_0001>

<llo_original>
// kernel: music_transformer_forward.11
$region0: #{music_transformer_forward.11}
  #allocation0 [shape = 'u32[]', space=smem, size = 0x4, offset = 0x4, fixed_abs, tag = 'smem constant byte address 0x4 - core index']
  #allocation1 [shape = 'u32[72,128]{1,0:T(1,128)}', space=vmem, size = 0x9000, scoped, tag = 'internal scratch']
  #allocation2 [shape = 'f32[16,96]{1,0:T(8,128)}', space=vmem, size = 0x2000, scoped, tag = 'scratch operand']
  %s0 = inlined_call_operand.vmem [shape: f32[16,32], index: 0, kind: input, shape index: {}]
  %s1 = inlined_call_operand.vmem [shape: f32[32,96], index: 1, kind: input, shape index: {}]
  %s2 = inlined_call_operand.vmem [shape: f32[1,96], index: 2, kind: input, shape index: {}]
  %s3 = inlined_call_operand.vmem [shape: f32[16,96], index: 3, kind: output, shape index: {}]
  %s4 = sld [smem:[#allocation0]]
  $region30: #{music_transformer_forward.11} parent=0
    _
  %s6 = ssub.s32 1, %s4
  %s7 = scalar_select 0, %s6, %s4
  // Predicated region
  $region2: #{music_transformer_forward.11} parent=0 // pred_check
    _
  $region3: #{music_transformer_forward.11} parent=0 // pred_check_branch
    %9 = sbr.rel (0) target = $region5
  $region4: #{music_transformer_forward.11} parent=0 // pred_region
    _
  $region5: #{music_transformer_forward.11} parent=0 // pred_fallthru
    _
  // Predicated region
  $region6: #{music_transformer_forward.11} parent=0 // pred_check
    _
  $region7: #{music_transformer_forward.11} parent=0 // pred_check_branch
    %11 = sbr.rel (0) target = $region9
  $region8: #{music_transformer_forward.11} parent=0 // pred_region
    _
  $region9: #{music_transformer_forward.11} parent=0 // pred_fallthru
    _
  // Predicated region
  $region10: #{music_transformer_forward.11} parent=0 // pred_check
    _
  $region11: #{music_transformer_forward.11} parent=0 // pred_check_branch
    %13 = sbr.rel (0) target = $region13
  $region12: #{music_transformer_forward.11} parent=0 // pred_region
    _
  $region13: #{music_transformer_forward.11} parent=0 // pred_fallthru
    _
  %p14 = scmp.eq.s32.totalorder 0, 0
  // Predicated region
  $region14: #{music_transformer_forward.11} parent=0 // pred_check
    %p15 = pneg %p14
  $region15: #{music_transformer_forward.11} parent=0 // pred_check_branch
    %17 = sbr.rel (%p15) target = $region17
  $region16: #{music_transformer_forward.11} parent=0 // pred_region
    %vm18 = vcmask 785408
    %19 = vst.msk [vmem:[#allocation2] sm:$0xff] %vm18, 0.0
    %20 = vst.msk [vmem:[#allocation2 + $0x8] sm:$0xff] %vm18, 0.0
  $region17: #{music_transformer_forward.11} parent=0 // pred_fallthru
    _
  %v21 = vld [vmem:[#allocation2] sm:$0xff]
  %v22 = vld [vmem:[#allocation2 + $0x8] sm:$0xff]
  %v23 = vld [vmem:[%s0] sm:$0xff]
  %v24 = vld [vmem:[%s0 + $0x8] sm:$0xff]
  %v25 = vld [vmem:[%s1] sm:$0xff]
  %v26 = vld [vmem:[%s1 + $0x8] sm:$0xff]
  %v27 = vld [vmem:[%s1 + $0x10] sm:$0xff]
  %v28 = vld [vmem:[%s1 + $0x18] sm:$0xff]
  %vm29 = vcmask 261120
  %v31 = vsel %vm29, %v23, 0
  %v34 = vsel %vm29, %v24, 0
  %36 = vmatpush.msra.mxu0 0.0
  %37 = vmatpush.msra.mxu0 0.0
  %38 = vmatpush.msra.mxu0 0.0
  %39 = vmatpush.msra.mxu0 0.0
  %40 = vmatpush.msra.mxu0 0.0
  %41 = vmatpush.msra.mxu0 0.0
  %42 = vmatpush.msra.mxu0 0.0
  %43 = vmatpush.msra.mxu0 0.0
  %44 = vmatpush.msra.mxu0 0.0
  %45 = vmatpush.msra.mxu0 0.0
  %46 = vmatpush.msra.mxu0 0.0
  %47 = vmatpush.msra.mxu0 0.0
  %48 = vmatpush.msra.mxu0 %v28
  %49 = vmatpush.msra.mxu0 %v27
  %50 = vmatpush.msra.mxu0 %v26
  %51 = vmatpush.msra.mxu0 %v25
  %52 = vmatmul.f32.gmra.mxu0 %v31
  %v53 = vpop.f32.mrf.mxu0
  %v54 = vadd.f32 0.0, %v53
  %55 = vmatmul.f32.gmra.mxu0 %v34
  %v56 = vpop.f32.mrf.mxu0
  %v57 = vadd.f32 0.0, %v56
  %58 = vdwg.mxu0
  %v59 = vadd.f32 %v21, %v54
  %v60 = vadd.f32 %v22, %v57
  %vm61 = vcmask 785408
  %62 = vst.msk [vmem:[#allocation2] sm:$0xff] %vm61, %v59
  %63 = vst.msk [vmem:[#allocation2 + $0x8] sm:$0xff] %vm61, %v60
  // Predicated region
  $region18: #{music_transformer_forward.11} parent=0 // pred_check
    %p64 = pneg %p14
  $region19: #{music_transformer_forward.11} parent=0 // pred_check_branch
    %66 = sbr.rel (%p64) target = $region21
  $region20: #{music_transformer_forward.11} parent=0 // pred_region
    %v67 = vld [vmem:[#allocation2] sm:$0xff]
    %v68 = vld [vmem:[#allocation2 + $0x8] sm:$0xff]
    %v69 = vld [vmem:[%s2] sm:$0x1]
    %v71 = vperm.slane %v69, 0
    %v73 = vadd.f32 %v67, %v71
    %v74 = vadd.f32 %v68, %v71
    %75 = vst.msk [vmem:[%s3] sm:$0xff] %vm61, %v73
    %76 = vst.msk [vmem:[%s3 + $0x8] sm:$0xff] %vm61, %v74
  $region21: #{music_transformer_forward.11} parent=0 // pred_fallthru
    _
  // Predicated region
  $region22: #{music_transformer_forward.11} parent=0 // pred_check
    _
  $region23: #{music_transformer_forward.11} parent=0 // pred_check_branch
    %78 = sbr.rel (0) target = $region25
  $region24: #{music_transformer_forward.11} parent=0 // pred_region
    _
  $region25: #{music_transformer_forward.11} parent=0 // pred_fallthru
    _
  // Predicated region
  $region26: #{music_transformer_forward.11} parent=0 // pred_check
    _
  $region27: #{music_transformer_forward.11} parent=0 // pred_check_branch
    %80 = sbr.rel (0) target = $region29
  $region28: #{music_transformer_forward.11} parent=0 // pred_region
    _
  $region29: #{music_transformer_forward.11} parent=0 // pred_fallthru
    _

// kernel: music_transformer_forward.14
$region0: #{music_transformer_forward.14}
  #allocation0 [shape = 'u32[]', space=smem, size = 0x4, offset = 0x4, fixed_abs, tag = 'smem constant byte address 0x4 - core index']
  #allocation1 [shape = 'u32[72,128]{1,0:T(1,128)}', space=vmem, size = 0x9000, scoped, tag = 'internal scratch']
  #allocation2 [shape = 'f32[16,64]{1,0:T(8,128)}', space=vmem, size = 0x2000, scoped, tag = 'scratch operand']
  %s0 = inlined_call_operand.vmem [shape: f32[16,32], index: 0, kind: input, shape index: {}]
  %s1 = inlined_call_operand.vmem [shape: f32[32,64], index: 1, kind: input, shape index: {}]
  %s2 = inlined_call_operand.vmem [shape: f32[1,64], index: 2, kind: input, shape index: {}]
  %s3 = inlined_call_operand.vmem [shape: f32[16,64], index: 3, kind: output, shape index: {}]
  %s4 = sld [smem:[#allocation0]]
  $region30: #{music_transformer_forward.14} parent=0
    _
  %s6 = ssub.s32 1, %s4
  %s7 = scalar_select 0, %s6, %s4
  // Predicated region
  $region2: #{music_transformer_forward.14} parent=0 // pred_check
    _
  $region3: #{music_transformer_forward.14} parent=0 // pred_check_branch
    %9 = sbr.rel (0) target = $region5
  $region4: #{music_transformer_forward.14} parent=0 // pred_region
    _
  $region5: #{music_transformer_forward.14} parent=0 // pred_fallthru
    _
  // Predicated region
  $region6: #{music_transformer_forward.14} parent=0 // pred_check
    _
  $region7: #{music_transformer_forward.14} parent=0 // pred_check_branch
    %11 = sbr.rel (0) target = $region9
  $region8: #{music_transformer_forward.14} parent=0 // pred_region
    _
  $region9: #{music_transformer_forward.14} parent=0 // pred_fallthru
    _
  // Predicated region
  $region10: #{music_transformer_forward.14} parent=0 // pred_check
    _
  $region11: #{music_transformer_forward.14} parent=0 // pred_check_branch
    %13 = sbr.rel (0) target = $region13
  $region12: #{music_transformer_forward.14} parent=0 // pred_region
    _
  $region13: #{music_transformer_forward.14} parent=0 // pred_fallthru
    _
  %p14 = scmp.eq.s32.totalorder 0, 0
  // Predicated region
  $region14: #{music_transformer_forward.14} parent=0 // pred_check
    %p15 = pneg %p14
  $region15: #{music_transformer_forward.14} parent=0 // pred_check_branch
    %17 = sbr.rel (%p15) target = $region17
  $region16: #{music_transformer_forward.14} parent=0 // pred_region
    %vm18 = vcmask 523264
    %19 = vst.msk [vmem:[#allocation2] sm:$0xff] %vm18, 0.0
    %20 = vst.msk [vmem:[#allocation2 + $0x8] sm:$0xff] %vm18, 0.0
  $region17: #{music_transformer_forward.14} parent=0 // pred_fallthru
    _
  %v21 = vld [vmem:[#allocation2] sm:$0xff]
  %v22 = vld [vmem:[#allocation2 + $0x8] sm:$0xff]
  %v23 = vld [vmem:[%s0] sm:$0xff]
  %v24 = vld [vmem:[%s0 + $0x8] sm:$0xff]
  %v25 = vld [vmem:[%s1] sm:$0xff]
  %v26 = vld [vmem:[%s1 + $0x8] sm:$0xff]
  %v27 = vld [vmem:[%s1 + $0x10] sm:$0xff]
  %v28 = vld [vmem:[%s1 + $0x18] sm:$0xff]
  %vm29 = vcmask 261120
  %v31 = vsel %vm29, %v23, 0
  %v34 = vsel %vm29, %v24, 0
  %36 = vmatpush.msra.mxu0 0.0
  %37 = vmatpush.msra.mxu0 0.0
  %38 = vmatpush.msra.mxu0 0.0
  %39 = vmatpush.msra.mxu0 0.0
  %40 = vmatpush.msra.mxu0 0.0
  %41 = vmatpush.msra.mxu0 0.0
  %42 = vmatpush.msra.mxu0 0.0
  %43 = vmatpush.msra.mxu0 0.0
  %44 = vmatpush.msra.mxu0 0.0
  %45 = vmatpush.msra.mxu0 0.0
  %46 = vmatpush.msra.mxu0 0.0
  %47 = vmatpush.msra.mxu0 0.0
  %48 = vmatpush.msra.mxu0 %v28
  %49 = vmatpush.msra.mxu0 %v27
  %50 = vmatpush.msra.mxu0 %v26
  %51 = vmatpush.msra.mxu0 %v25
  %52 = vmatmul.f32.gmra.mxu0 %v31
  %v53 = vpop.f32.mrf.mxu0
  %v54 = vadd.f32 0.0, %v53
  %55 = vmatmul.f32.gmra.mxu0 %v34
  %v56 = vpop.f32.mrf.mxu0
  %v57 = vadd.f32 0.0, %v56
  %58 = vdwg.mxu0
  %v59 = vadd.f32 %v21, %v54
  %v60 = vadd.f32 %v22, %v57
  %vm61 = vcmask 523264
  %62 = vst.msk [vmem:[#allocation2] sm:$0xff] %vm61, %v59
  %63 = vst.msk [vmem:[#allocation2 + $0x8] sm:$0xff] %vm61, %v60
  // Predicated region
  $region18: #{music_transformer_forward.14} parent=0 // pred_check
    %p64 = pneg %p14
  $region19: #{music_transformer_forward.14} parent=0 // pred_check_branch
    %66 = sbr.rel (%p64) target = $region21
  $region20: #{music_transformer_forward.14} parent=0 // pred_region
    %v67 = vld [vmem:[#allocation2] sm:$0xff]
    %v68 = vld [vmem:[#allocation2 + $0x8] sm:$0xff]
    %v69 = vld [vmem:[%s2] sm:$0x1]
    %v71 = vperm.slane %v69, 0
    %v73 = vadd.f32 %v67, %v71
    %v74 = vadd.f32 %v68, %v71
    %v75 = vmax.f32 %v73, 0.0
    %v76 = vmax.f32 %v74, 0.0
    %77 = vst.msk [vmem:[%s3] sm:$0xff] %vm61, %v75
    %78 = vst.msk [vmem:[%s3 + $0x8] sm:$0xff] %vm61, %v76
  $region21: #{music_transformer_forward.14} parent=0 // pred_fallthru
    _
  // Predicated region
  $region22: #{music_transformer_forward.14} parent=0 // pred_check
    _
  $region23: #{music_transformer_forward.14} parent=0 // pred_check_branch
    %80 = sbr.rel (0) target = $region25
  $region24: #{music_transformer_forward.14} parent=0 // pred_region
    _
  $region25: #{music_transformer_forward.14} parent=0 // pred_fallthru
    _
  // Predicated region
  $region26: #{music_transformer_forward.14} parent=0 // pred_check
    _
  $region27: #{music_transformer_forward.14} parent=0 // pred_check_branch
    %82 = sbr.rel (0) target = $region29
  $region28: #{music_transformer_forward.14} parent=0 // pred_region
    _
  $region29: #{music_transformer_forward.14} parent=0 // pred_fallthru
    _

// kernel: music_transformer_forward.13
$region0: #{music_transformer_forward.13}
  #allocation0 [shape = 'u32[]', space=smem, size = 0x4, offset = 0x4, fixed_abs, tag = 'smem constant byte address 0x4 - core index']
  #allocation1 [shape = 'u32[72,128]{1,0:T(1,128)}', space=vmem, size = 0x9000, scoped, tag = 'internal scratch']
  #allocation2 [shape = 'f32[16,32]{1,0:T(8,128)}', space=vmem, size = 0x2000, scoped, tag = 'scratch operand']
  %s0 = inlined_call_operand.vmem [shape: f32[16,32], index: 0, kind: input, shape index: {}]
  %s1 = inlined_call_operand.vmem [shape: f32[32,32], index: 1, kind: input, shape index: {}]
  %s2 = inlined_call_operand.vmem [shape: f32[1,32], index: 2, kind: input, shape index: {}]
  %s3 = inlined_call_operand.vmem [shape: f32[16,32], index: 3, kind: input, shape index: {}]
  %s4 = inlined_call_operand.vmem [shape: f32[1,32], index: 4, kind: input, shape index: {}]
  %s5 = inlined_call_operand.vmem [shape: f32[1,32], index: 5, kind: input, shape index: {}]
  %s6 = inlined_call_operand.vmem [shape: f32[16,32], index: 6, kind: output, shape index: {}]
  %s7 = sld [smem:[#allocation0]]
  $region42: #{music_transformer_forward.13} parent=0
    _
  %s9 = ssub.s32 1, %s7
  %s10 = scalar_select 0, %s9, %s7
  // Predicated region
  $region2: #{music_transformer_forward.13} parent=0 // pred_check
    _
  $region3: #{music_transformer_forward.13} parent=0 // pred_check_branch
    %12 = sbr.rel (0) target = $region5
  $region4: #{music_transformer_forward.13} parent=0 // pred_region
    _
  $region5: #{music_transformer_forward.13} parent=0 // pred_fallthru
    _
  // Predicated region
  $region6: #{music_transformer_forward.13} parent=0 // pred_check
    _
  $region7: #{music_transformer_forward.13} parent=0 // pred_check_branch
    %14 = sbr.rel (0) target = $region9
  $region8: #{music_transformer_forward.13} parent=0 // pred_region
    _
  $region9: #{music_transformer_forward.13} parent=0 // pred_fallthru
    _
  // Predicated region
  $region10: #{music_transformer_forward.13} parent=0 // pred_check
    _
  $region11: #{music_transformer_forward.13} parent=0 // pred_check_branch
    %16 = sbr.rel (0) target = $region13
  $region12: #{music_transformer_forward.13} parent=0 // pred_region
    _
  $region13: #{music_transformer_forward.13} parent=0 // pred_fallthru
    _
  // Predicated region
  $region14: #{music_transformer_forward.13} parent=0 // pred_check
    _
  $region15: #{music_transformer_forward.13} parent=0 // pred_check_branch
    %18 = sbr.rel (0) target = $region17
  $region16: #{music_transformer_forward.13} parent=0 // pred_region
    _
  $region17: #{music_transformer_forward.13} parent=0 // pred_fallthru
    _
  // Predicated region
  $region18: #{music_transformer_forward.13} parent=0 // pred_check
    _
  $region19: #{music_transformer_forward.13} parent=0 // pred_check_branch
    %20 = sbr.rel (0) target = $region21
  $region20: #{music_transformer_forward.13} parent=0 // pred_region
    _
  $region21: #{music_transformer_forward.13} parent=0 // pred_fallthru
    _
  // Predicated region
  $region22: #{music_transformer_forward.13} parent=0 // pred_check
    _
  $region23: #{music_transformer_forward.13} parent=0 // pred_check_branch
    %22 = sbr.rel (0) target = $region25
  $region24: #{music_transformer_forward.13} parent=0 // pred_region
    _
  $region25: #{music_transformer_forward.13} parent=0 // pred_fallthru
    _
  %p23 = scmp.eq.s32.totalorder 0, 0
  // Predicated region
  $region26: #{music_transformer_forward.13} parent=0 // pred_check
    %p24 = pneg %p23
  $region27: #{music_transformer_forward.13} parent=0 // pred_check_branch
    %26 = sbr.rel (%p24) target = $region29
  $region28: #{music_transformer_forward.13} parent=0 // pred_region
    %vm27 = vcmask 261120
    %28 = vst.msk [vmem:[#allocation2] sm:$0xff] %vm27, 0.0
    %29 = vst.msk [vmem:[#allocation2 + $0x8] sm:$0xff] %vm27, 0.0
  $region29: #{music_transformer_forward.13} parent=0 // pred_fallthru
    _
  %v30 = vld [vmem:[#allocation2] sm:$0xff]
  %v31 = vld [vmem:[#allocation2 + $0x8] sm:$0xff]
  %v32 = vld [vmem:[%s0] sm:$0xff]
  %v33 = vld [vmem:[%s0 + $0x8] sm:$0xff]
  %v34 = vld [vmem:[%s1] sm:$0xff]
  %v35 = vld [vmem:[%s1 + $0x8] sm:$0xff]
  %v36 = vld [vmem:[%s1 + $0x10] sm:$0xff]
  %v37 = vld [vmem:[%s1 + $0x18] sm:$0xff]
  %vm38 = vcmask 261120
  %v40 = vsel %vm38, %v32, 0
  %v43 = vsel %vm38, %v33, 0
  %45 = vmatpush.msra.mxu0 0.0
  %46 = vmatpush.msra.mxu0 0.0
  %47 = vmatpush.msra.mxu0 0.0
  %48 = vmatpush.msra.mxu0 0.0
  %49 = vmatpush.msra.mxu0 0.0
  %50 = vmatpush.msra.mxu0 0.0
  %51 = vmatpush.msra.mxu0 0.0
  %52 = vmatpush.msra.mxu0 0.0
  %53 = vmatpush.msra.mxu0 0.0
  %54 = vmatpush.msra.mxu0 0.0
  %55 = vmatpush.msra.mxu0 0.0
  %56 = vmatpush.msra.mxu0 0.0
  %57 = vmatpush.msra.mxu0 %v37
  %58 = vmatpush.msra.mxu0 %v36
  %59 = vmatpush.msra.mxu0 %v35
  %60 = vmatpush.msra.mxu0 %v34
  %61 = vmatmul.f32.gmra.mxu0 %v40
  %v62 = vpop.f32.mrf.mxu0
  %v63 = vadd.f32 0.0, %v62
  %64 = vmatmul.f32.gmra.mxu0 %v43
  %v65 = vpop.f32.mrf.mxu0
  %v66 = vadd.f32 0.0, %v65
  %67 = vdwg.mxu0
  %v68 = vadd.f32 %v30, %v63
  %v69 = vadd.f32 %v31, %v66
  %70 = vst.msk [vmem:[#allocation2] sm:$0xff] %vm38, %v68
  %71 = vst.msk [vmem:[#allocation2 + $0x8] sm:$0xff] %vm38, %v69
  // Predicated region
  $region30: #{music_transformer_forward.13} parent=0 // pred_check
    %p72 = pneg %p23
  $region31: #{music_transformer_forward.13} parent=0 // pred_check_branch
    %74 = sbr.rel (%p72) target = $region33
  $region32: #{music_transformer_forward.13} parent=0 // pred_region
    %v75 = vld [vmem:[#allocation2] sm:$0xff]
    %v76 = vld [vmem:[#allocation2 + $0x8] sm:$0xff]
    %v77 = vld [vmem:[%s2] sm:$0x1]
    %v79 = vperm.slane %v77, 0
    %v81 = vadd.f32 %v75, %v79
    %v82 = vadd.f32 %v76, %v79
    %v83 = vld [vmem:[%s3] sm:$0xff]
    %v84 = vld [vmem:[%s3 + $0x8] sm:$0xff]
    %v85 = vadd.f32 %v81, %v83
    %v86 = vadd.f32 %v82, %v84
    %v87 = vsel %vm38, %v85, 0.0
    %88 = vadd.xlane.f32.xlu0 %v87
    %v89 = vpop.xlane.xlu0 %88
    %v90 = vsel %vm38, %v86, 0.0
    %91 = vadd.xlane.f32.xlu0 %v90
    %v92 = vpop.xlane.xlu0 %91
    %v93 = vrcp.pop 32.0
    %v94 = vmul.f32 32.0, %v93
    %v95 = vsub.f32 1.0, %v94
    %v96 = vmul.f32 %v93, %v95
    %v97 = vadd.f32 %v93, %v96
    %vm98 = vweird.f32 %v93
    %v99 = vsel %vm98, %v93, %v97
    %v100 = vmul.f32 %v89, %v99
    %v101 = vmul.f32 %v92, %v99
    %v102 = vsub.f32 %v85, %v100
    %v103 = vsub.f32 %v86, %v101
    %v104 = vmul.f32 %v102, %v102
    %v105 = vmul.f32 %v103, %v103
    %v106 = vsel %vm38, %v104, 0.0
    %107 = vadd.xlane.f32.xlu0 %v106
    %v108 = vpop.xlane.xlu0 %107
    %v109 = vsel %vm38, %v105, 0.0
    %110 = vadd.xlane.f32.xlu0 %v109
    %v111 = vpop.xlane.xlu0 %110
    %v112 = vmul.f32 %v108, %v99
    %v113 = vmul.f32 %v111, %v99
    %v114 = vadd.f32 %v112, 1e-06
    %v115 = vadd.f32 %v113, 1e-06
    %v116 = vrsqrt.pop %v114
    %v117 = vmul.f32 %v116, %v114
    %v118 = vmul.f32 %v117, %v116
    %v119 = vmul.f32 0.5, %v118
    %v120 = vsub.f32 1.5, %v119
    %v121 = vmul.f32 %v116, %v120
    %vm122 = vweird.f32 %v114
    %vm123 = vweird.f32 %v116
    %vm124 = vmor %vm122, %vm123
    %v125 = vsel %vm124, %v116, %v121
    %v126 = vrsqrt.pop %v115
    %v127 = vmul.f32 %v126, %v115
    %v128 = vmul.f32 %v127, %v126
    %v129 = vmul.f32 0.5, %v128
    %v130 = vsub.f32 1.5, %v129
    %v131 = vmul.f32 %v126, %v130
    %vm132 = vweird.f32 %v115
    %vm133 = vweird.f32 %v126
    %vm134 = vmor %vm132, %vm133
    %v135 = vsel %vm134, %v126, %v131
    %v136 = vmul.f32 %v102, %v125
    %v137 = vmul.f32 %v103, %v135
    %v138 = vld [vmem:[%s4] sm:$0x1]
    %v140 = vperm.slane %v138, 0
    %v142 = vmul.f32 %v136, %v140
    %v143 = vmul.f32 %v137, %v140
    %v144 = vld [vmem:[%s5] sm:$0x1]
    %v146 = vperm.slane %v144, 0
    %v148 = vadd.f32 %v142, %v146
    %v149 = vadd.f32 %v143, %v146
    %150 = vst.msk [vmem:[%s6] sm:$0xff] %vm38, %v148
    %151 = vst.msk [vmem:[%s6 + $0x8] sm:$0xff] %vm38, %v149
  $region33: #{music_transformer_forward.13} parent=0 // pred_fallthru
    _
  // Predicated region
  $region34: #{music_transformer_forward.13} parent=0 // pred_check
    _
  $region35: #{music_transformer_forward.13} parent=0 // pred_check_branch
    %153 = sbr.rel (0) target = $region37
  $region36: #{music_transformer_forward.13} parent=0 // pred_region
    _
  $region37: #{music_transformer_forward.13} parent=0 // pred_fallthru
    _
  // Predicated region
  $region38: #{music_transformer_forward.13} parent=0 // pred_check
    _
  $region39: #{music_transformer_forward.13} parent=0 // pred_check_branch
    %155 = sbr.rel (0) target = $region41
  $region40: #{music_transformer_forward.13} parent=0 // pred_region
    _
  $region41: #{music_transformer_forward.13} parent=0 // pred_fallthru
    _

// kernel: music_transformer_forward.12
$region0: #{music_transformer_forward.12}
  #allocation0 [shape = 'u32[]', space=smem, size = 0x4, offset = 0x4, fixed_abs, tag = 'smem constant byte address 0x4 - core index']
  #allocation1 [shape = 'u32[72,128]{1,0:T(1,128)}', space=vmem, size = 0x9000, scoped, tag = 'internal scratch']
  %s0 = inlined_call_operand.vmem [shape: f32[2,8,96], index: 0, kind: input, shape index: {}]
  %s1 = inlined_call_operand.vmem [shape: f32[8,8], index: 1, kind: input, shape index: {}]
  %s2 = inlined_call_operand.vmem [shape: f32[2,1,8], index: 2, kind: input, shape index: {}]
  %s3 = inlined_call_operand.vmem [shape: f32[2,8,32], index: 3, kind: output, shape index: {}]
  %s4 = sld [smem:[#allocation0]]
  $region45: #{music_transformer_forward.12} parent=0
    _
  %s6 = ssub.s32 1, %s4
  %s7 = scalar_select 0, %s6, %s4
  loop: start=0, step=1, limit=4
  $region2: #{music_transformer_forward.12} parent=0 // loop_pre_header
    _
  $region3: #{music_transformer_forward.12} parent=0 // loop_header
    %s9 = sphi 0, %s13
    %p10 = scmp.ge.s32.totalorder %s9, 4
    %s19 = sphi 0, %s21
    %s22 = sphi 0, %s19
    %s23 = sphi 0, %s22
    %s39 = sphi 0, %s23
    %s43 = sphi 0, %s43
    %s45 = sphi 0, %s43
    %s46 = sphi 0, %s45
    %s60 = sphi 0, %s46
    %s66 = sphi 0, %s68
    %s69 = sphi 0, %s66
    %s70 = sphi 0, %s69
    %s86 = sphi 0, %s70
    %s92 = sphi 0, %s94
    %s95 = sphi 0, %s92
    %s96 = sphi 0, %s95
    %s112 = sphi 0, %s96
  $region4: #{music_transformer_forward.12} parent=0 // loop_header_branch
    %12 = sbr.rel (%p10) target = $region8
  $region5: #{music_transformer_forward.12} parent=0 // loop_body
    %s14 = ssub.s32 %s9, 1
    %s15 = ssub.s32 %s9, 2
    %s16 = sadd.s32 %s9, 1
    %s17 = ssub.s32 %s9, %s16
    %p18 = scmp.eq.s32.totalorder %s17, 0
    %s20 = sadd.s32 %s19, 1
    %s21 = scalar_select %p18, %s19, %s20
    %p24 = pneg %p18
    %p25 = scmp.eq.s32.totalorder %s9, 1
    %p26 = por %p24, %p25
    %p27 = scmp.ne.s32.totalorder %s19, %s22
    %p28 = scmp.eq.s32.totalorder %s9, 0
    %p29 = por %p27, %p28
    %p30 = scmp.ne.s32.totalorder %s19, %s22
    %p31 = scmp.eq.s32.totalorder %s14, 1
    %p32 = por %p30, %p31
    %p33 = scmp.ne.s32.totalorder %s22, %s23
    %p34 = scmp.eq.s32.totalorder %s14, 0
    %p35 = por %p33, %p34
    %p36 = scmp.ne.s32.totalorder %s22, %s23
    %p37 = scmp.eq.s32.totalorder %s15, 1
    %p38 = por %p36, %p37
    %p40 = scmp.ne.s32.totalorder %s23, %s39
    %p41 = scmp.eq.s32.totalorder %s15, 0
    %p42 = por %p40, %p41
    %s44 = sadd.s32 %s43, 1
    %p47 = scmp.eq.s32.totalorder %s9, 1
    %p48 = scmp.ne.s32.totalorder %s43, %s45
    %p49 = scmp.eq.s32.totalorder %s9, 0
    %p50 = por %p48, %p49
    %p51 = scmp.ne.s32.totalorder %s43, %s45
    %p52 = scmp.eq.s32.totalorder %s14, 1
    %p53 = por %p51, %p52
    %p54 = scmp.ne.s32.totalorder %s45, %s46
    %p55 = scmp.eq.s32.totalorder %s14, 0
    %p56 = por %p54, %p55
    %p57 = scmp.ne.s32.totalorder %s45, %s46
    %p58 = scmp.eq.s32.totalorder %s15, 1
    %p59 = por %p57, %p58
    %p61 = scmp.ne.s32.totalorder %s46, %s60
    %p62 = scmp.eq.s32.totalorder %s15, 0
    %p63 = por %p61, %p62
    %s64 = ssub.s32 %s9, %s16
    %p65 = scmp.eq.s32.totalorder %s64, 0
    %s67 = sadd.s32 %s66, 1
    %s68 = scalar_select %p65, %s66, %s67
    %p71 = pneg %p65
    %p72 = scmp.eq.s32.totalorder %s9, 1
    %p73 = por %p71, %p72
    %p74 = scmp.ne.s32.totalorder %s66, %s69
    %p75 = scmp.eq.s32.totalorder %s9, 0
    %p76 = por %p74, %p75
    %p77 = scmp.ne.s32.totalorder %s66, %s69
    %p78 = scmp.eq.s32.totalorder %s14, 1
    %p79 = por %p77, %p78
    %p80 = scmp.ne.s32.totalorder %s69, %s70
    %p81 = scmp.eq.s32.totalorder %s14, 0
    %p82 = por %p80, %p81
    %p83 = scmp.ne.s32.totalorder %s69, %s70
    %p84 = scmp.eq.s32.totalorder %s15, 1
    %p85 = por %p83, %p84
    %p87 = scmp.ne.s32.totalorder %s70, %s86
    %p88 = scmp.eq.s32.totalorder %s15, 0
    %p89 = por %p87, %p88
    %s90 = ssub.s32 %s9, %s16
    %p91 = scmp.eq.s32.totalorder %s90, 0
    %s93 = sadd.s32 %s92, 1
    %s94 = scalar_select %p91, %s92, %s93
    %p97 = pneg %p91
    %p98 = scmp.eq.s32.totalorder %s9, 1
    %p99 = por %p97, %p98
    %p100 = scmp.ne.s32.totalorder %s92, %s95
    %p101 = scmp.eq.s32.totalorder %s9, 0
    %p102 = por %p100, %p101
    %p103 = scmp.ne.s32.totalorder %s92, %s95
    %p104 = scmp.eq.s32.totalorder %s14, 1
    %p105 = por %p103, %p104
    %p106 = scmp.ne.s32.totalorder %s95, %s96
    %p107 = scmp.eq.s32.totalorder %s14, 0
    %p108 = por %p106, %p107
    %p109 = scmp.ne.s32.totalorder %s95, %s96
    %p110 = scmp.eq.s32.totalorder %s15, 1
    %p111 = por %p109, %p110
    %p113 = scmp.ne.s32.totalorder %s96, %s112
    %p114 = scmp.eq.s32.totalorder %s15, 0
    %p115 = por %p113, %p114
    %p116 = scmp.le.s32.totalorder 1, %s9
    %p117 = scmp.lt.s32.totalorder %s9, 3
    %p118 = pnand %p116, %p117
    %p119 = pneg %p118
    // Predicated region
    $region9: #{music_transformer_forward.12} parent=5 // pred_check
      _
    $region10: #{music_transformer_forward.12} parent=5 // pred_check_branch
      %121 = sbr.rel (%p118) target = $region12
    $region11: #{music_transformer_forward.12} parent=5 // pred_region
      %s122 = ssub.s32 %s9, 1
      // Predicated region
      $region13: #{music_transformer_forward.12} parent=11 // pred_check
        %p123 = pneg %p56
      $region14: #{music_transformer_forward.12} parent=11 // pred_check_branch
        %125 = sbr.rel (%p123) target = $region16
      $region15: #{music_transformer_forward.12} parent=11 // pred_region
        _
      $region16: #{music_transformer_forward.12} parent=11 // pred_fallthru
        _
    $region12: #{music_transformer_forward.12} parent=5 // pred_fallthru
      _
    %p126 = scmp.lt.s32.totalorder %s9, 2
    // Predicated region
    $region17: #{music_transformer_forward.12} parent=5 // pred_check
      %p127 = pneg %p126
    $region18: #{music_transformer_forward.12} parent=5 // pred_check_branch
      %129 = sbr.rel (%p127) target = $region20
    $region19: #{music_transformer_forward.12} parent=5 // pred_region
      // Predicated region
      $region21: #{music_transformer_forward.12} parent=19 // pred_check
        %p130 = pneg %p29
      $region22: #{music_transformer_forward.12} parent=19 // pred_check_branch
        %132 = sbr.rel (%p130) target = $region24
      $region23: #{music_transformer_forward.12} parent=19 // pred_region
        %p133 = scmp.lt.s32.totalorder %s9, 1
        %s134 = scalar_select %p133, %s9, 1
        %s135 = smul.addr %s134, 8
        %s136 = scalar_lea.vmem %s0, %s135
      $region24: #{music_transformer_forward.12} parent=19 // pred_fallthru
        _
      // Predicated region
      $region25: #{music_transformer_forward.12} parent=19 // pred_check
        %p137 = pneg %p76
      $region26: #{music_transformer_forward.12} parent=19 // pred_check_branch
        %139 = sbr.rel (%p137) target = $region28
      $region27: #{music_transformer_forward.12} parent=19 // pred_region
        %p140 = scmp.lt.s32.totalorder %s9, 1
        %s141 = scalar_select %p140, %s9, 1
        %s142 = scalar_lea.vmem %s2, %s141
      $region28: #{music_transformer_forward.12} parent=19 // pred_fallthru
        _
    $region20: #{music_transformer_forward.12} parent=5 // pred_fallthru
      _
    %p143 = scmp.le.s32.totalorder 1, %s9
    %p144 = scmp.lt.s32.totalorder %s9, 3
    %p145 = pnand %p143, %p144
    %p146 = pneg %p145
    // Predicated region
    $region29: #{music_transformer_forward.12} parent=5 // pred_check
      _
    $region30: #{music_transformer_forward.12} parent=5 // pred_check_branch
      %148 = sbr.rel (%p145) target = $region32
    $region31: #{music_transformer_forward.12} parent=5 // pred_region
      %s149 = ssub.s32 %s9, 1
      %p150 = scmp.lt.s32.totalorder %s14, 1
      %s151 = scalar_select %p150, %s14, 1
      %s152 = smul.addr %s151, 8
      %s153 = scalar_lea.vmem %s0, %s152
      %p154 = pneg %p35
      %p155 = pneg %p32
      %p156 = pneg %p56
      %p157 = pneg %p53
      %p158 = scmp.lt.s32.totalorder %s14, 1
      %s159 = scalar_select %p158, %s14, 1
      %s160 = scalar_lea.vmem %s2, %s159
      %p161 = pneg %p82
      %p162 = pneg %p79
      %p163 = pneg %p108
      %p164 = pneg %p105
      %p165 = scmp.lt.s32.totalorder %s14, 1
      %s166 = scalar_select %p165, %s14, 1
      %s167 = smul.addr %s166, 8
      %s168 = scalar_lea.vmem %s3, %s167
      %p169 = scmp.lt.s32.totalorder %s14, 1
      %s170 = scalar_select %p169, %s14, 1
      %s171 = smul.addr %s170, 8
      %s172 = scalar_lea.vmem %s0, %s171
      %p173 = scmp.lt.s32.totalorder %s14, 1
      %s174 = scalar_select %p173, %s14, 1
      %s175 = scalar_lea.vmem %s2, %s174
      %p176 = scmp.lt.s32.totalorder %s14, 1
      %s177 = scalar_select %p176, %s14, 1
      %s178 = smul.addr %s177, 8
      %s179 = scalar_lea.vmem %s3, %s178
      %v180 = vld [vmem:[%s172] sm:$0xff]
      %v181 = vld [vmem:[%s1] sm:$0xff]
      %v182 = vld [vmem:[%s175] sm:$0x1]
      %v183 = vlaneseq
      %v184 = vshrl.u32 %v183, 7
      %v185 = vlaneseq
      %v186 = vand.u32 %v185, 127
      %vm187 = vcmp.gt.s32.totalorder %v186, %v184
      %vm188 = vcmp.gt.f32.partialorder %v182, 0.5
      %v189 = vsel %vm188, 1, 0
      %v190 = vperm.slane %v189, 0
      %vm191 = vcmp.eq.s32.totalorder %v190, 1
      %vm192 = vmor %vm187, %vm191
      %v193 = vsel %vm192, -1e+30, 0.0
      %v194 = vsub.s32 7, %v184
      %vm195 = vcmp.ge.s32.totalorder %v186, %v194
      %v196 = vsel %vm195, 1, 0
      %v197 = vcvt.s32.f32 %v196
      %vm198 = vcmask 64512
      %v200 = vsel %vm198, %v180, 0
      %v203 = vsel %vm198, %v181, 0
      %205 = vmatpush.xpose.msra.mxu0 0.0
      %206 = vmatpush.xpose.msra.mxu0 0.0
      %207 = vmatpush.xpose.msra.mxu0 0.0
      %208 = vmatpush.xpose.msra.mxu0 0.0
      %209 = vmatpush.xpose.msra.mxu0 0.0
      %210 = vmatpush.xpose.msra.mxu0 0.0
      %211 = vmatpush.xpose.msra.mxu0 0.0
      %212 = vmatpush.xpose.msra.mxu0 0.0
      %213 = vmatpush.xpose.msra.mxu0 0.0
      %214 = vmatpush.xpose.msra.mxu0 0.0
      %215 = vmatpush.xpose.msra.mxu0 0.0
      %216 = vmatpush.xpose.msra.mxu0 0.0
      %217 = vmatpush.xpose.msra.mxu0 0.0
      %218 = vmatpush.xpose.msra.mxu0 0.0
      %219 = vmatpush.xpose.msra.mxu0 0.0
      %220 = vmatpush.xpose.msra.mxu0 %v203
      %221 = vmatmul.f32.gmra.mxu0 %v200
      %v222 = vpop.f32.mrf.mxu0
      %v223 = vadd.f32 0.0, %v222
      %224 = vdwg.mxu0
      %v225 = vmul.f32 %v223, %v197
      %v226 = vadd.s32 %v184, 1
      %vm227 = vcmp.lt.s32.totalorder %v226, 0
      %v228 = vsub.s32 0, %v226
      %v229 = vsel %vm227, %v228, %v226
      %v230 = vshrl.u32 %v229, 3
      %v231 = vand.u32 %v229, 7
      %v232 = vsub.s32 0, %v231
      %v233 = vsel %vm227, %v232, %v231
      %vm234 = vcmp.ne.s32.totalorder %v233, 0
      %vm235 = vcmp.lt.s32.totalorder %v233, 0
      %vm236 = vmand %vm235, %vm234
      %v237 = vadd.s32 %v233, 8
      %v238 = vsel %vm236, %v237, %v233
      %240 = vrot.lane.b32.xlu0 %v225, 121
      %v241 = vpop.permute.xlu0 %240
      %243 = vrot.lane.b32.xlu0 %v225, 1
      %v244 = vpop.permute.xlu0 %243
      %vm246 = vcmask 7168
      %v247 = vsel %vm246, %v241, %v244
      %v248 = vand.u32 %v238, 1
      %vm249 = vcmp.ne.s32.totalorder %v248, 0
      %v250 = vsel %vm249, 1, 0
      %vm251 = vcmp.eq.s32.totalorder %v250, 1
      %v252 = vsel %vm251, %v247, %v225
      %254 = vrot.lane.b32.xlu0 %v252, 122
      %v255 = vpop.permute.xlu0 %254
      %257 = vrot.lane.b32.xlu0 %v252, 2
      %v258 = vpop.permute.xlu0 %257
      %vm260 = vcmask 15360
      %v261 = vsel %vm260, %v255, %v258
      %v262 = vand.u32 %v238, 2
      %vm263 = vcmp.ne.s32.totalorder %v262, 0
      %v264 = vsel %vm263, 1, 0
      %vm265 = vcmp.eq.s32.totalorder %v264, 1
      %v266 = vsel %vm265, %v261, %v252
      %268 = vrot.lane.b32.xlu0 %v266, 124
      %v269 = vpop.permute.xlu0 %268
      %271 = vrot.lane.b32.xlu0 %v266, 4
      %v272 = vpop.permute.xlu0 %271
      %vm274 = vcmask 31744
      %v275 = vsel %vm274, %v269, %v272
      %v276 = vand.u32 %v238, 4
      %vm277 = vcmp.ne.s32.totalorder %v276, 0
      %v278 = vsel %vm277, 1, 0
      %vm279 = vcmp.eq.s32.totalorder %v278, 1
      %v280 = vsel %vm279, %v275, %v266
      %281 = vrot.lane.b32.xlu0 %v180, 96
      %v282 = vpop.permute.xlu0 %281
      %v283 = vsel %vm198, %v282, 0
      %285 = vmatpush.xpose.msra.mxu0 0.0
      %286 = vmatpush.xpose.msra.mxu0 0.0
      %287 = vmatpush.xpose.msra.mxu0 0.0
      %288 = vmatpush.xpose.msra.mxu0 0.0
      %289 = vmatpush.xpose.msra.mxu0 0.0
      %290 = vmatpush.xpose.msra.mxu0 0.0
      %291 = vmatpush.xpose.msra.mxu0 0.0
      %292 = vmatpush.xpose.msra.mxu0 0.0
      %293 = vmatpush.xpose.msra.mxu0 0.0
      %294 = vmatpush.xpose.msra.mxu0 0.0
      %295 = vmatpush.xpose.msra.mxu0 0.0
      %296 = vmatpush.xpose.msra.mxu0 0.0
      %297 = vmatpush.xpose.msra.mxu0 0.0
      %298 = vmatpush.xpose.msra.mxu0 0.0
      %299 = vmatpush.xpose.msra.mxu0 0.0
      %300 = vmatpush.xpose.msra.mxu0 %v283
      %301 = vmatmul.f32.gmra.mxu0 %v200
      %v302 = vpop.f32.mrf.mxu0
      %v303 = vadd.f32 %v280, %v302
      %304 = vdwg.mxu0
      %v305 = vmul.f32 %v303, 0.35355338
      %v306 = vadd.f32 %v305, %v193
      %v307 = vsel %vm198, %v306, -inf
      %308 = vmax.xlane.f32.xlu0 %v307
      %v309 = vpop.xlane.xlu0 %308
      %v310 = vsub.f32 %v306, %v309
      %v311 = vmul.f32 %v310, 1.442695
      %v312 = vpow.pop %v311
      %v313 = vsel %vm198, %v312, 0.0
      %314 = vadd.xlane.f32.xlu0 %v313
      %v315 = vpop.xlane.xlu0 %314
      %v316 = vrcp.pop %v315
      %v317 = vmul.f32 %v315, %v316
      %v318 = vsub.f32 1.0, %v317
      %v319 = vmul.f32 %v316, %v318
      %v320 = vadd.f32 %v316, %v319
      %vm321 = vweird.f32 %v315
      %vm322 = vweird.f32 %v316
      %vm323 = vmor %vm321, %vm322
      %v324 = vsel %vm323, %v316, %v320
      %v325 = vand.u32 2147483647, %v315
      %vm326 = vcmp.eq.f32.partialorder %v325, 8.507059e+37
      %v327 = vand.u32 %v315, 2147483648
      %v328 = vor.u32 1.1754944e-38, %v327
      %v329 = vsel %vm326, %v328, %v324
      %v330 = vmul.f32 %v312, %v329
      %331 = vrot.lane.b32.xlu0 %v180, 64
      %v332 = vpop.permute.xlu0 %331
      %v335 = vsel %vm198, %v330, 0
      %337 = vmatpush.msra.mxu0 0.0
      %338 = vmatpush.msra.mxu0 0.0
      %339 = vmatpush.msra.mxu0 0.0
      %340 = vmatpush.msra.mxu0 0.0
      %341 = vmatpush.msra.mxu0 0.0
      %342 = vmatpush.msra.mxu0 0.0
      %343 = vmatpush.msra.mxu0 0.0
      %344 = vmatpush.msra.mxu0 0.0
      %345 = vmatpush.msra.mxu0 0.0
      %346 = vmatpush.msra.mxu0 0.0
      %347 = vmatpush.msra.mxu0 0.0
      %348 = vmatpush.msra.mxu0 0.0
      %349 = vmatpush.msra.mxu0 0.0
      %350 = vmatpush.msra.mxu0 0.0
      %351 = vmatpush.msra.mxu0 0.0
      %352 = vmatpush.msra.mxu0 %v332
      %353 = vmatmul.f32.gmra.mxu0 %v335
      %v354 = vpop.f32.mrf.mxu0
      %v355 = vadd.f32 0.0, %v354
      %356 = vdwg.mxu0
      %357 = vrot.lane.b32.xlu0 %v180, 120
      %v358 = vpop.permute.xlu0 %357
      %v359 = vsel %vm198, %v358, 0
      %361 = vmatpush.xpose.msra.mxu0 0.0
      %362 = vmatpush.xpose.msra.mxu0 0.0
      %363 = vmatpush.xpose.msra.mxu0 0.0
      %364 = vmatpush.xpose.msra.mxu0 0.0
      %365 = vmatpush.xpose.msra.mxu0 0.0
      %366 = vmatpush.xpose.msra.mxu0 0.0
      %367 = vmatpush.xpose.msra.mxu0 0.0
      %368 = vmatpush.xpose.msra.mxu0 0.0
      %369 = vmatpush.xpose.msra.mxu0 0.0
      %370 = vmatpush.xpose.msra.mxu0 0.0
      %371 = vmatpush.xpose.msra.mxu0 0.0
      %372 = vmatpush.xpose.msra.mxu0 0.0
      %373 = vmatpush.xpose.msra.mxu0 0.0
      %374 = vmatpush.xpose.msra.mxu0 0.0
      %375 = vmatpush.xpose.msra.mxu0 0.0
      %376 = vmatpush.xpose.msra.mxu0 %v203
      %377 = vmatmul.f32.gmra.mxu0 %v359
      %v378 = vpop.f32.mrf.mxu0
      %v379 = vadd.f32 0.0, %v378
      %380 = vdwg.mxu0
      %v381 = vmul.f32 %v379, %v197
      %383 = vrot.lane.b32.xlu0 %v381, 121
      %v384 = vpop.permute.xlu0 %383
      %386 = vrot.lane.b32.xlu0 %v381, 1
      %v387 = vpop.permute.xlu0 %386
      %v389 = vsel %vm246, %v384, %v387
      %v390 = vsel %vm251, %v389, %v381
      %392 = vrot.lane.b32.xlu0 %v390, 122
      %v393 = vpop.permute.xlu0 %392
      %395 = vrot.lane.b32.xlu0 %v390, 2
      %v396 = vpop.permute.xlu0 %395
      %v398 = vsel %vm260, %v393, %v396
      %v399 = vsel %vm265, %v398, %v390
      %401 = vrot.lane.b32.xlu0 %v399, 124
      %v402 = vpop.permute.xlu0 %401
      %404 = vrot.lane.b32.xlu0 %v399, 4
      %v405 = vpop.permute.xlu0 %404
      %v407 = vsel %vm274, %v402, %v405
      %v408 = vsel %vm279, %v407, %v399
      %409 = vrot.lane.b32.xlu0 %v180, 88
      %v410 = vpop.permute.xlu0 %409
      %v411 = vsel %vm198, %v410, 0
      %413 = vmatpush.xpose.msra.mxu0 0.0
      %414 = vmatpush.xpose.msra.mxu0 0.0
      %415 = vmatpush.xpose.msra.mxu0 0.0
      %416 = vmatpush.xpose.msra.mxu0 0.0
      %417 = vmatpush.xpose.msra.mxu0 0.0
      %418 = vmatpush.xpose.msra.mxu0 0.0
      %419 = vmatpush.xpose.msra.mxu0 0.0
      %420 = vmatpush.xpose.msra.mxu0 0.0
      %421 = vmatpush.xpose.msra.mxu0 0.0
      %422 = vmatpush.xpose.msra.mxu0 0.0
      %423 = vmatpush.xpose.msra.mxu0 0.0
      %424 = vmatpush.xpose.msra.mxu0 0.0
      %425 = vmatpush.xpose.msra.mxu0 0.0
      %426 = vmatpush.xpose.msra.mxu0 0.0
      %427 = vmatpush.xpose.msra.mxu0 0.0
      %428 = vmatpush.xpose.msra.mxu0 %v411
      %429 = vmatmul.f32.gmra.mxu0 %v359
      %v430 = vpop.f32.mrf.mxu0
      %v431 = vadd.f32 %v408, %v430
      %432 = vdwg.mxu0
      %v433 = vmul.f32 %v431, 0.35355338
      %v434 = vadd.f32 %v433, %v193
      %v435 = vsel %vm198, %v434, -inf
      %436 = vmax.xlane.f32.xlu0 %v435
      %v437 = vpop.xlane.xlu0 %436
      %v438 = vsub.f32 %v434, %v437
      %v439 = vmul.f32 %v438, 1.442695
      %v440 = vpow.pop %v439
      %v441 = vsel %vm198, %v440, 0.0
      %442 = vadd.xlane.f32.xlu0 %v441
      %v443 = vpop.xlane.xlu0 %442
      %v444 = vrcp.pop %v443
      %v445 = vmul.f32 %v443, %v444
      %v446 = vsub.f32 1.0, %v445
      %v447 = vmul.f32 %v444, %v446
      %v448 = vadd.f32 %v444, %v447
      %vm449 = vweird.f32 %v443
      %vm450 = vweird.f32 %v444
      %vm451 = vmor %vm449, %vm450
      %v452 = vsel %vm451, %v444, %v448
      %v453 = vand.u32 2147483647, %v443
      %vm454 = vcmp.eq.f32.partialorder %v453, 8.507059e+37
      %v455 = vand.u32 %v443, 2147483648
      %v456 = vor.u32 1.1754944e-38, %v455
      %v457 = vsel %vm454, %v456, %v452
      %v458 = vmul.f32 %v440, %v457
      %459 = vrot.lane.b32.xlu0 %v180, 56
      %v460 = vpop.permute.xlu0 %459
      %v463 = vsel %vm198, %v458, 0
      %465 = vmatpush.msra.mxu0 0.0
      %466 = vmatpush.msra.mxu0 0.0
      %467 = vmatpush.msra.mxu0 0.0
      %468 = vmatpush.msra.mxu0 0.0
      %469 = vmatpush.msra.mxu0 0.0
      %470 = vmatpush.msra.mxu0 0.0
      %471 = vmatpush.msra.mxu0 0.0
      %472 = vmatpush.msra.mxu0 0.0
      %473 = vmatpush.msra.mxu0 0.0
      %474 = vmatpush.msra.mxu0 0.0
      %475 = vmatpush.msra.mxu0 0.0
      %476 = vmatpush.msra.mxu0 0.0
      %477 = vmatpush.msra.mxu0 0.0
      %478 = vmatpush.msra.mxu0 0.0
      %479 = vmatpush.msra.mxu0 0.0
      %480 = vmatpush.msra.mxu0 %v460
      %481 = vmatmul.f32.gmra.mxu0 %v463
      %v482 = vpop.f32.mrf.mxu0
      %v483 = vadd.f32 0.0, %v482
      %484 = vdwg.mxu0
      %485 = vrot.lane.b32.xlu0 %v180, 112
      %v486 = vpop.permute.xlu0 %485
      %v487 = vsel %vm198, %v486, 0
      %489 = vmatpush.xpose.msra.mxu0 0.0
      %490 = vmatpush.xpose.msra.mxu0 0.0
      %491 = vmatpush.xpose.msra.mxu0 0.0
      %492 = vmatpush.xpose.msra.mxu0 0.0
      %493 = vmatpush.xpose.msra.mxu0 0.0
      %494 = vmatpush.xpose.msra.mxu0 0.0
      %495 = vmatpush.xpose.msra.mxu0 0.0
      %496 = vmatpush.xpose.msra.mxu0 0.0
      %497 = vmatpush.xpose.msra.mxu0 0.0
      %498 = vmatpush.xpose.msra.mxu0 0.0
      %499 = vmatpush.xpose.msra.mxu0 0.0
      %500 = vmatpush.xpose.msra.mxu0 0.0
      %501 = vmatpush.xpose.msra.mxu0 0.0
      %502 = vmatpush.xpose.msra.mxu0 0.0
      %503 = vmatpush.xpose.msra.mxu0 0.0
      %504 = vmatpush.xpose.msra.mxu0 %v203
      %505 = vmatmul.f32.gmra.mxu0 %v487
      %v506 = vpop.f32.mrf.mxu0
      %v507 = vadd.f32 0.0, %v506
      %508 = vdwg.mxu0
      %v509 = vmul.f32 %v507, %v197
      %511 = vrot.lane.b32.xlu0 %v509, 121
      %v512 = vpop.permute.xlu0 %511
      %514 = vrot.lane.b32.xlu0 %v509, 1
      %v515 = vpop.permute.xlu0 %514
      %v517 = vsel %vm246, %v512, %v515
      %v518 = vsel %vm251, %v517, %v509
      %520 = vrot.lane.b32.xlu0 %v518, 122
      %v521 = vpop.permute.xlu0 %520
      %523 = vrot.lane.b32.xlu0 %v518, 2
      %v524 = vpop.permute.xlu0 %523
      %v526 = vsel %vm260, %v521, %v524
      %v527 = vsel %vm265, %v526, %v518
      %529 = vrot.lane.b32.xlu0 %v527, 124
      %v530 = vpop.permute.xlu0 %529
      %532 = vrot.lane.b32.xlu0 %v527, 4
      %v533 = vpop.permute.xlu0 %532
      %v535 = vsel %vm274, %v530, %v533
      %v536 = vsel %vm279, %v535, %v527
      %537 = vrot.lane.b32.xlu0 %v180, 80
      %v538 = vpop.permute.xlu0 %537
      %v539 = vsel %vm198, %v538, 0
      %541 = vmatpush.xpose.msra.mxu0 0.0
      %542 = vmatpush.xpose.msra.mxu0 0.0
      %543 = vmatpush.xpose.msra.mxu0 0.0
      %544 = vmatpush.xpose.msra.mxu0 0.0
      %545 = vmatpush.xpose.msra.mxu0 0.0
      %546 = vmatpush.xpose.msra.mxu0 0.0
      %547 = vmatpush.xpose.msra.mxu0 0.0
      %548 = vmatpush.xpose.msra.mxu0 0.0
      %549 = vmatpush.xpose.msra.mxu0 0.0
      %550 = vmatpush.xpose.msra.mxu0 0.0
      %551 = vmatpush.xpose.msra.mxu0 0.0
      %552 = vmatpush.xpose.msra.mxu0 0.0
      %553 = vmatpush.xpose.msra.mxu0 0.0
      %554 = vmatpush.xpose.msra.mxu0 0.0
      %555 = vmatpush.xpose.msra.mxu0 0.0
      %556 = vmatpush.xpose.msra.mxu0 %v539
      %557 = vmatmul.f32.gmra.mxu0 %v487
      %v558 = vpop.f32.mrf.mxu0
      %v559 = vadd.f32 %v536, %v558
      %560 = vdwg.mxu0
      %v561 = vmul.f32 %v559, 0.35355338
      %v562 = vadd.f32 %v561, %v193
      %v563 = vsel %vm198, %v562, -inf
      %564 = vmax.xlane.f32.xlu0 %v563
      %v565 = vpop.xlane.xlu0 %564
      %v566 = vsub.f32 %v562, %v565
      %v567 = vmul.f32 %v566, 1.442695
      %v568 = vpow.pop %v567
      %v569 = vsel %vm198, %v568, 0.0
      %570 = vadd.xlane.f32.xlu0 %v569
      %v571 = vpop.xlane.xlu0 %570
      %v572 = vrcp.pop %v571
      %v573 = vmul.f32 %v571, %v572
      %v574 = vsub.f32 1.0, %v573
      %v575 = vmul.f32 %v572, %v574
      %v576 = vadd.f32 %v572, %v575
      %vm577 = vweird.f32 %v571
      %vm578 = vweird.f32 %v572
      %vm579 = vmor %vm577, %vm578
      %v580 = vsel %vm579, %v572, %v576
      %v581 = vand.u32 2147483647, %v571
      %vm582 = vcmp.eq.f32.partialorder %v581, 8.507059e+37
      %v583 = vand.u32 %v571, 2147483648
      %v584 = vor.u32 1.1754944e-38, %v583
      %v585 = vsel %vm582, %v584, %v580
      %v586 = vmul.f32 %v568, %v585
      %587 = vrot.lane.b32.xlu0 %v180, 48
      %v588 = vpop.permute.xlu0 %587
      %v591 = vsel %vm198, %v586, 0
      %593 = vmatpush.msra.mxu0 0.0
      %594 = vmatpush.msra.mxu0 0.0
      %595 = vmatpush.msra.mxu0 0.0
      %596 = vmatpush.msra.mxu0 0.0
      %597 = vmatpush.msra.mxu0 0.0
      %598 = vmatpush.msra.mxu0 0.0
      %599 = vmatpush.msra.mxu0 0.0
      %600 = vmatpush.msra.mxu0 0.0
      %601 = vmatpush.msra.mxu0 0.0
      %602 = vmatpush.msra.mxu0 0.0
      %603 = vmatpush.msra.mxu0 0.0
      %604 = vmatpush.msra.mxu0 0.0
      %605 = vmatpush.msra.mxu0 0.0
      %606 = vmatpush.msra.mxu0 0.0
      %607 = vmatpush.msra.mxu0 0.0
      %608 = vmatpush.msra.mxu0 %v588
      %609 = vmatmul.f32.gmra.mxu0 %v591
      %v610 = vpop.f32.mrf.mxu0
      %v611 = vadd.f32 0.0, %v610
      %612 = vdwg.mxu0
      %613 = vrot.lane.b32.xlu0 %v180, 104
      %v614 = vpop.permute.xlu0 %613
      %v615 = vsel %vm198, %v614, 0
      %617 = vmatpush.xpose.msra.mxu0 0.0
      %618 = vmatpush.xpose.msra.mxu0 0.0
      %619 = vmatpush.xpose.msra.mxu0 0.0
      %620 = vmatpush.xpose.msra.mxu0 0.0
      %621 = vmatpush.xpose.msra.mxu0 0.0
      %622 = vmatpush.xpose.msra.mxu0 0.0
      %623 = vmatpush.xpose.msra.mxu0 0.0
      %624 = vmatpush.xpose.msra.mxu0 0.0
      %625 = vmatpush.xpose.msra.mxu0 0.0
      %626 = vmatpush.xpose.msra.mxu0 0.0
      %627 = vmatpush.xpose.msra.mxu0 0.0
      %628 = vmatpush.xpose.msra.mxu0 0.0
      %629 = vmatpush.xpose.msra.mxu0 0.0
      %630 = vmatpush.xpose.msra.mxu0 0.0
      %631 = vmatpush.xpose.msra.mxu0 0.0
      %632 = vmatpush.xpose.msra.mxu0 %v203
      %633 = vmatmul.f32.gmra.mxu0 %v615
      %v634 = vpop.f32.mrf.mxu0
      %v635 = vadd.f32 0.0, %v634
      %636 = vdwg.mxu0
      %v637 = vmul.f32 %v635, %v197
      %639 = vrot.lane.b32.xlu0 %v637, 121
      %v640 = vpop.permute.xlu0 %639
      %642 = vrot.lane.b32.xlu0 %v637, 1
      %v643 = vpop.permute.xlu0 %642
      %v645 = vsel %vm246, %v640, %v643
      %v646 = vsel %vm251, %v645, %v637
      %648 = vrot.lane.b32.xlu0 %v646, 122
      %v649 = vpop.permute.xlu0 %648
      %651 = vrot.lane.b32.xlu0 %v646, 2
      %v652 = vpop.permute.xlu0 %651
      %v654 = vsel %vm260, %v649, %v652
      %v655 = vsel %vm265, %v654, %v646
      %657 = vrot.lane.b32.xlu0 %v655, 124
      %v658 = vpop.permute.xlu0 %657
      %660 = vrot.lane.b32.xlu0 %v655, 4
      %v661 = vpop.permute.xlu0 %660
      %v663 = vsel %vm274, %v658, %v661
      %v664 = vsel %vm279, %v663, %v655
      %665 = vrot.lane.b32.xlu0 %v180, 72
      %v666 = vpop.permute.xlu0 %665
      %v667 = vsel %vm198, %v666, 0
      %669 = vmatpush.xpose.msra.mxu0 0.0
      %670 = vmatpush.xpose.msra.mxu0 0.0
      %671 = vmatpush.xpose.msra.mxu0 0.0
      %672 = vmatpush.xpose.msra.mxu0 0.0
      %673 = vmatpush.xpose.msra.mxu0 0.0
      %674 = vmatpush.xpose.msra.mxu0 0.0
      %675 = vmatpush.xpose.msra.mxu0 0.0
      %676 = vmatpush.xpose.msra.mxu0 0.0
      %677 = vmatpush.xpose.msra.mxu0 0.0
      %678 = vmatpush.xpose.msra.mxu0 0.0
      %679 = vmatpush.xpose.msra.mxu0 0.0
      %680 = vmatpush.xpose.msra.mxu0 0.0
      %681 = vmatpush.xpose.msra.mxu0 0.0
      %682 = vmatpush.xpose.msra.mxu0 0.0
      %683 = vmatpush.xpose.msra.mxu0 0.0
      %684 = vmatpush.xpose.msra.mxu0 %v667
      %685 = vmatmul.f32.gmra.mxu0 %v615
      %v686 = vpop.f32.mrf.mxu0
      %v687 = vadd.f32 %v664, %v686
      %688 = vdwg.mxu0
      %v689 = vmul.f32 %v687, 0.35355338
      %v690 = vadd.f32 %v689, %v193
      %v691 = vsel %vm198, %v690, -inf
      %692 = vmax.xlane.f32.xlu0 %v691
      %v693 = vpop.xlane.xlu0 %692
      %v694 = vsub.f32 %v690, %v693
      %v695 = vmul.f32 %v694, 1.442695
      %v696 = vpow.pop %v695
      %v697 = vsel %vm198, %v696, 0.0
      %698 = vadd.xlane.f32.xlu0 %v697
      %v699 = vpop.xlane.xlu0 %698
      %v700 = vrcp.pop %v699
      %v701 = vmul.f32 %v699, %v700
      %v702 = vsub.f32 1.0, %v701
      %v703 = vmul.f32 %v700, %v702
      %v704 = vadd.f32 %v700, %v703
      %vm705 = vweird.f32 %v699
      %vm706 = vweird.f32 %v700
      %vm707 = vmor %vm705, %vm706
      %v708 = vsel %vm707, %v700, %v704
      %v709 = vand.u32 2147483647, %v699
      %vm710 = vcmp.eq.f32.partialorder %v709, 8.507059e+37
      %v711 = vand.u32 %v699, 2147483648
      %v712 = vor.u32 1.1754944e-38, %v711
      %v713 = vsel %vm710, %v712, %v708
      %v714 = vmul.f32 %v696, %v713
      %715 = vrot.lane.b32.xlu0 %v180, 40
      %v716 = vpop.permute.xlu0 %715
      %v719 = vsel %vm198, %v714, 0
      %721 = vmatpush.msra.mxu0 0.0
      %722 = vmatpush.msra.mxu0 0.0
      %723 = vmatpush.msra.mxu0 0.0
      %724 = vmatpush.msra.mxu0 0.0
      %725 = vmatpush.msra.mxu0 0.0
      %726 = vmatpush.msra.mxu0 0.0
      %727 = vmatpush.msra.mxu0 0.0
      %728 = vmatpush.msra.mxu0 0.0
      %729 = vmatpush.msra.mxu0 0.0
      %730 = vmatpush.msra.mxu0 0.0
      %731 = vmatpush.msra.mxu0 0.0
      %732 = vmatpush.msra.mxu0 0.0
      %733 = vmatpush.msra.mxu0 0.0
      %734 = vmatpush.msra.mxu0 0.0
      %735 = vmatpush.msra.mxu0 0.0
      %736 = vmatpush.msra.mxu0 %v716
      %737 = vmatmul.f32.gmra.mxu0 %v719
      %v738 = vpop.f32.mrf.mxu0
      %v739 = vadd.f32 0.0, %v738
      %740 = vdwg.mxu0
      %742 = vrot.lane.b32.xlu0 %v483, 8
      %v743 = vpop.permute.xlu0 %742
      %746 = vrot.lane.b32.xlu0 %v611, 16
      %v747 = vpop.permute.xlu0 %746
      %750 = vrot.lane.b32.xlu0 %v739, 24
      %v751 = vpop.permute.xlu0 %750
      %v753 = vsel %vm198, %v355, %v743
      %vm754 = vcmask 130048
      %v755 = vsel %vm754, %v753, %v747
      %vm756 = vcmask 195584
      %v757 = vsel %vm756, %v755, %v751
      %vm758 = vcmask 261120
      %759 = vst.msk [vmem:[%s179] sm:$0xff] %vm758, %v757
      %p760 = scmp.lt.s32.totalorder %s14, 1
      %s761 = scalar_select %p760, %s14, 1
      %s762 = smul.addr %s761, 8
      %s763 = scalar_lea.vmem %s3, %s762
      // Predicated region
      $region33: #{music_transformer_forward.12} parent=31 // pred_check
        %p764 = pneg %p105
      $region34: #{music_transformer_forward.12} parent=31 // pred_check_branch
        %766 = sbr.rel (%p764) target = $region36
      $region35: #{music_transformer_forward.12} parent=31 // pred_region
        _
      $region36: #{music_transformer_forward.12} parent=31 // pred_fallthru
        _
    $region32: #{music_transformer_forward.12} parent=5 // pred_fallthru
      _
    %p767 = scmp.le.s32.totalorder 2, %s9
    // Predicated region
    $region37: #{music_transformer_forward.12} parent=5 // pred_check
      %p768 = pneg %p767
    $region38: #{music_transformer_forward.12} parent=5 // pred_check_branch
      %770 = sbr.rel (%p768) target = $region40
    $region39: #{music_transformer_forward.12} parent=5 // pred_region
      %s771 = ssub.s32 %s9, 2
      // Predicated region
      $region41: #{music_transformer_forward.12} parent=39 // pred_check
        %p772 = pneg %p111
      $region42: #{music_transformer_forward.12} parent=39 // pred_check_branch
        %774 = sbr.rel (%p772) target = $region44
      $region43: #{music_transformer_forward.12} parent=39 // pred_region
        %p775 = scmp.lt.s32.totalorder %s15, 1
        %s776 = scalar_select %p775, %s15, 1
        %s777 = smul.addr %s776, 8
        %s778 = scalar_lea.vmem %s3, %s777
      $region44: #{music_transformer_forward.12} parent=39 // pred_fallthru
        _
    $region40: #{music_transformer_forward.12} parent=5 // pred_fallthru
      _
  $region6: #{music_transformer_forward.12} parent=0 // loop_footer
    %s13 = sadd.s32 1, %s9
  $region7: #{music_transformer_forward.12} parent=0 // loop_footer_branch
    %8 = sbr.rel target = $region3
  $region8: #{music_transformer_forward.12} parent=0 // loop_exit
    _

// kernel: music_transformer_forward.15
$region0: #{music_transformer_forward.15}
  #allocation0 [shape = 'u32[]', space=smem, size = 0x4, offset = 0x4, fixed_abs, tag = 'smem constant byte address 0x4 - core index']
  #allocation1 [shape = 'u32[72,128]{1,0:T(1,128)}', space=vmem, size = 0x9000, scoped, tag = 'internal scratch']
  #allocation2 [shape = 'f32[16,32]{1,0:T(8,128)}', space=vmem, size = 0x2000, scoped, tag = 'scratch operand']
  %s0 = inlined_call_operand.vmem [shape: f32[16,64], index: 0, kind: input, shape index: {}]
  %s1 = inlined_call_operand.vmem [shape: f32[64,32], index: 1, kind: input, shape index: {}]
  %s2 = inlined_call_operand.vmem [shape: f32[1,32], index: 2, kind: input, shape index: {}]
  %s3 = inlined_call_operand.vmem [shape: f32[16,32], index: 3, kind: input, shape index: {}]
  %s4 = inlined_call_operand.vmem [shape: f32[1,32], index: 4, kind: input, shape index: {}]
  %s5 = inlined_call_operand.vmem [shape: f32[1,32], index: 5, kind: input, shape index: {}]
  %s6 = inlined_call_operand.vmem [shape: f32[16,32], index: 6, kind: output, shape index: {}]
  %s7 = sld [smem:[#allocation0]]
  $region42: #{music_transformer_forward.15} parent=0
    _
  %s9 = ssub.s32 1, %s7
  %s10 = scalar_select 0, %s9, %s7
  // Predicated region
  $region2: #{music_transformer_forward.15} parent=0 // pred_check
    _
  $region3: #{music_transformer_forward.15} parent=0 // pred_check_branch
    %12 = sbr.rel (0) target = $region5
  $region4: #{music_transformer_forward.15} parent=0 // pred_region
    _
  $region5: #{music_transformer_forward.15} parent=0 // pred_fallthru
    _
  // Predicated region
  $region6: #{music_transformer_forward.15} parent=0 // pred_check
    _
  $region7: #{music_transformer_forward.15} parent=0 // pred_check_branch
    %14 = sbr.rel (0) target = $region9
  $region8: #{music_transformer_forward.15} parent=0 // pred_region
    _
  $region9: #{music_transformer_forward.15} parent=0 // pred_fallthru
    _
  // Predicated region
  $region10: #{music_transformer_forward.15} parent=0 // pred_check
    _
  $region11: #{music_transformer_forward.15} parent=0 // pred_check_branch
    %16 = sbr.rel (0) target = $region13
  $region12: #{music_transformer_forward.15} parent=0 // pred_region
    _
  $region13: #{music_transformer_forward.15} parent=0 // pred_fallthru
    _
  // Predicated region
  $region14: #{music_transformer_forward.15} parent=0 // pred_check
    _
  $region15: #{music_transformer_forward.15} parent=0 // pred_check_branch
    %18 = sbr.rel (0) target = $region17
  $region16: #{music_transformer_forward.15} parent=0 // pred_region
    _
  $region17: #{music_transformer_forward.15} parent=0 // pred_fallthru
    _
  // Predicated region
  $region18: #{music_transformer_forward.15} parent=0 // pred_check
    _
  $region19: #{music_transformer_forward.15} parent=0 // pred_check_branch
    %20 = sbr.rel (0) target = $region21
  $region20: #{music_transformer_forward.15} parent=0 // pred_region
    _
  $region21: #{music_transformer_forward.15} parent=0 // pred_fallthru
    _
  // Predicated region
  $region22: #{music_transformer_forward.15} parent=0 // pred_check
    _
  $region23: #{music_transformer_forward.15} parent=0 // pred_check_branch
    %22 = sbr.rel (0) target = $region25
  $region24: #{music_transformer_forward.15} parent=0 // pred_region
    _
  $region25: #{music_transformer_forward.15} parent=0 // pred_fallthru
    _
  %p23 = scmp.eq.s32.totalorder 0, 0
  // Predicated region
  $region26: #{music_transformer_forward.15} parent=0 // pred_check
    %p24 = pneg %p23
  $region27: #{music_transformer_forward.15} parent=0 // pred_check_branch
    %26 = sbr.rel (%p24) target = $region29
  $region28: #{music_transformer_forward.15} parent=0 // pred_region
    %vm27 = vcmask 261120
    %28 = vst.msk [vmem:[#allocation2] sm:$0xff] %vm27, 0.0
    %29 = vst.msk [vmem:[#allocation2 + $0x8] sm:$0xff] %vm27, 0.0
  $region29: #{music_transformer_forward.15} parent=0 // pred_fallthru
    _
  %v30 = vld [vmem:[#allocation2] sm:$0xff]
  %v31 = vld [vmem:[#allocation2 + $0x8] sm:$0xff]
  %v32 = vld [vmem:[%s0] sm:$0xff]
  %v33 = vld [vmem:[%s0 + $0x8] sm:$0xff]
  %v34 = vld [vmem:[%s1] sm:$0xff]
  %v35 = vld [vmem:[%s1 + $0x8] sm:$0xff]
  %v36 = vld [vmem:[%s1 + $0x10] sm:$0xff]
  %v37 = vld [vmem:[%s1 + $0x18] sm:$0xff]
  %v38 = vld [vmem:[%s1 + $0x20] sm:$0xff]
  %v39 = vld [vmem:[%s1 + $0x28] sm:$0xff]
  %v40 = vld [vmem:[%s1 + $0x30] sm:$0xff]
  %v41 = vld [vmem:[%s1 + $0x38] sm:$0xff]
  %vm42 = vcmask 523264
  %v44 = vsel %vm42, %v32, 0
  %v47 = vsel %vm42, %v33, 0
  %49 = vmatpush.msra.mxu0 0.0
  %50 = vmatpush.msra.mxu0 0.0
  %51 = vmatpush.msra.mxu0 0.0
  %52 = vmatpush.msra.mxu0 0.0
  %53 = vmatpush.msra.mxu0 0.0
  %54 = vmatpush.msra.mxu0 0.0
  %55 = vmatpush.msra.mxu0 0.0
  %56 = vmatpush.msra.mxu0 0.0
  %57 = vmatpush.msra.mxu0 %v41
  %58 = vmatpush.msra.mxu0 %v40
  %59 = vmatpush.msra.mxu0 %v39
  %60 = vmatpush.msra.mxu0 %v38
  %61 = vmatpush.msra.mxu0 %v37
  %62 = vmatpush.msra.mxu0 %v36
  %63 = vmatpush.msra.mxu0 %v35
  %64 = vmatpush.msra.mxu0 %v34
  %65 = vmatmul.f32.gmra.mxu0 %v44
  %v66 = vpop.f32.mrf.mxu0
  %v67 = vadd.f32 0.0, %v66
  %68 = vmatmul.f32.gmra.mxu0 %v47
  %v69 = vpop.f32.mrf.mxu0
  %v70 = vadd.f32 0.0, %v69
  %71 = vdwg.mxu0
  %v72 = vadd.f32 %v30, %v67
  %v73 = vadd.f32 %v31, %v70
  %vm74 = vcmask 261120
  %75 = vst.msk [vmem:[#allocation2] sm:$0xff] %vm74, %v72
  %76 = vst.msk [vmem:[#allocation2 + $0x8] sm:$0xff] %vm74, %v73
  // Predicated region
  $region30: #{music_transformer_forward.15} parent=0 // pred_check
    %p77 = pneg %p23
  $region31: #{music_transformer_forward.15} parent=0 // pred_check_branch
    %79 = sbr.rel (%p77) target = $region33
  $region32: #{music_transformer_forward.15} parent=0 // pred_region
    %v80 = vld [vmem:[#allocation2] sm:$0xff]
    %v81 = vld [vmem:[#allocation2 + $0x8] sm:$0xff]
    %v82 = vld [vmem:[%s2] sm:$0x1]
    %v84 = vperm.slane %v82, 0
    %v86 = vadd.f32 %v80, %v84
    %v87 = vadd.f32 %v81, %v84
    %v88 = vld [vmem:[%s3] sm:$0xff]
    %v89 = vld [vmem:[%s3 + $0x8] sm:$0xff]
    %v90 = vadd.f32 %v86, %v88
    %v91 = vadd.f32 %v87, %v89
    %v92 = vsel %vm74, %v90, 0.0
    %93 = vadd.xlane.f32.xlu0 %v92
    %v94 = vpop.xlane.xlu0 %93
    %v95 = vsel %vm74, %v91, 0.0
    %96 = vadd.xlane.f32.xlu0 %v95
    %v97 = vpop.xlane.xlu0 %96
    %v98 = vrcp.pop 32.0
    %v99 = vmul.f32 32.0, %v98
    %v100 = vsub.f32 1.0, %v99
    %v101 = vmul.f32 %v98, %v100
    %v102 = vadd.f32 %v98, %v101
    %vm103 = vweird.f32 %v98
    %v104 = vsel %vm103, %v98, %v102
    %v105 = vmul.f32 %v94, %v104
    %v106 = vmul.f32 %v97, %v104
    %v107 = vsub.f32 %v90, %v105
    %v108 = vsub.f32 %v91, %v106
    %v109 = vmul.f32 %v107, %v107
    %v110 = vmul.f32 %v108, %v108
    %v111 = vsel %vm74, %v109, 0.0
    %112 = vadd.xlane.f32.xlu0 %v111
    %v113 = vpop.xlane.xlu0 %112
    %v114 = vsel %vm74, %v110, 0.0
    %115 = vadd.xlane.f32.xlu0 %v114
    %v116 = vpop.xlane.xlu0 %115
    %v117 = vmul.f32 %v113, %v104
    %v118 = vmul.f32 %v116, %v104
    %v119 = vadd.f32 %v117, 1e-06
    %v120 = vadd.f32 %v118, 1e-06
    %v121 = vrsqrt.pop %v119
    %v122 = vmul.f32 %v121, %v119
    %v123 = vmul.f32 %v122, %v121
    %v124 = vmul.f32 0.5, %v123
    %v125 = vsub.f32 1.5, %v124
    %v126 = vmul.f32 %v121, %v125
    %vm127 = vweird.f32 %v119
    %vm128 = vweird.f32 %v121
    %vm129 = vmor %vm127, %vm128
    %v130 = vsel %vm129, %v121, %v126
    %v131 = vrsqrt.pop %v120
    %v132 = vmul.f32 %v131, %v120
    %v133 = vmul.f32 %v132, %v131
    %v134 = vmul.f32 0.5, %v133
    %v135 = vsub.f32 1.5, %v134
    %v136 = vmul.f32 %v131, %v135
    %vm137 = vweird.f32 %v120
    %vm138 = vweird.f32 %v131
    %vm139 = vmor %vm137, %vm138
    %v140 = vsel %vm139, %v131, %v136
    %v141 = vmul.f32 %v107, %v130
    %v142 = vmul.f32 %v108, %v140
    %v143 = vld [vmem:[%s4] sm:$0x1]
    %v145 = vperm.slane %v143, 0
    %v147 = vmul.f32 %v141, %v145
    %v148 = vmul.f32 %v142, %v145
    %v149 = vld [vmem:[%s5] sm:$0x1]
    %v151 = vperm.slane %v149, 0
    %v153 = vadd.f32 %v147, %v151
    %v154 = vadd.f32 %v148, %v151
    %155 = vst.msk [vmem:[%s6] sm:$0xff] %vm74, %v153
    %156 = vst.msk [vmem:[%s6 + $0x8] sm:$0xff] %vm74, %v154
  $region33: #{music_transformer_forward.15} parent=0 // pred_fallthru
    _
  // Predicated region
  $region34: #{music_transformer_forward.15} parent=0 // pred_check
    _
  $region35: #{music_transformer_forward.15} parent=0 // pred_check_branch
    %158 = sbr.rel (0) target = $region37
  $region36: #{music_transformer_forward.15} parent=0 // pred_region
    _
  $region37: #{music_transformer_forward.15} parent=0 // pred_fallthru
    _
  // Predicated region
  $region38: #{music_transformer_forward.15} parent=0 // pred_check
    _
  $region39: #{music_transformer_forward.15} parent=0 // pred_check_branch
    %160 = sbr.rel (0) target = $region41
  $region40: #{music_transformer_forward.15} parent=0 // pred_region
    _
  $region41: #{music_transformer_forward.15} parent=0 // pred_fallthru
    _

// kernel: music_transformer_forward.21
$region0: #{music_transformer_forward.21}
  #allocation0 [shape = 'u32[]', space=smem, size = 0x4, offset = 0x4, fixed_abs, tag = 'smem constant byte address 0x4 - core index']
  #allocation1 [shape = 'u32[72,128]{1,0:T(1,128)}', space=vmem, size = 0x9000, scoped, tag = 'internal scratch']
  #allocation2 [shape = 'f32[16,40]{1,0:T(8,128)}', space=vmem, size = 0x2000, scoped, tag = 'scratch operand']
  %s0 = inlined_call_operand.vmem [shape: f32[16,32], index: 0, kind: input, shape index: {}]
  %s1 = inlined_call_operand.vmem [shape: f32[32,40], index: 1, kind: input, shape index: {}]
  %s2 = inlined_call_operand.vmem [shape: f32[1,40], index: 2, kind: input, shape index: {}]
  %s3 = inlined_call_operand.hbm [shape: f32[16,40], index: 3, kind: output, shape index: {}]
  %s4 = sld [smem:[#allocation0]]
  $region30: #{music_transformer_forward.21} parent=0
    _
  %s6 = ssub.s32 1, %s4
  %s7 = scalar_select 0, %s6, %s4
  $region1: #{music_transformer_forward.21} parent=0
    #allocation3 [shape = 'u8[8192]{0}', space=vmem, size = 0x2000, scoped, tag = 'output window, operand 0, single buffered']
    #allocation4 [shape = 's32[1]{0}', space=sflag, size = 0x4, scoped, tag = 'scoped memory for music_transformer_forward.21']
    %8 = vsyncpa [#allocation4], 0
    // Predicated region
    $region2: #{music_transformer_forward.21} parent=1 // pred_check
      _
    $region3: #{music_transformer_forward.21} parent=1 // pred_check_branch
      %10 = sbr.rel (0) target = $region5
    $region4: #{music_transformer_forward.21} parent=1 // pred_region
      _
    $region5: #{music_transformer_forward.21} parent=1 // pred_fallthru
      _
    // Predicated region
    $region6: #{music_transformer_forward.21} parent=1 // pred_check
      _
    $region7: #{music_transformer_forward.21} parent=1 // pred_check_branch
      %12 = sbr.rel (0) target = $region9
    $region8: #{music_transformer_forward.21} parent=1 // pred_region
      _
    $region9: #{music_transformer_forward.21} parent=1 // pred_fallthru
      _
    // Predicated region
    $region10: #{music_transformer_forward.21} parent=1 // pred_check
      _
    $region11: #{music_transformer_forward.21} parent=1 // pred_check_branch
      %14 = sbr.rel (0) target = $region13
    $region12: #{music_transformer_forward.21} parent=1 // pred_region
      _
    $region13: #{music_transformer_forward.21} parent=1 // pred_fallthru
      _
    %p15 = scmp.eq.s32.totalorder 0, 0
    // Predicated region
    $region14: #{music_transformer_forward.21} parent=1 // pred_check
      %p16 = pneg %p15
    $region15: #{music_transformer_forward.21} parent=1 // pred_check_branch
      %18 = sbr.rel (%p16) target = $region17
    $region16: #{music_transformer_forward.21} parent=1 // pred_region
      %vm19 = vcmask 326656
      %20 = vst.msk [vmem:[#allocation2] sm:$0xff] %vm19, 0.0
      %21 = vst.msk [vmem:[#allocation2 + $0x8] sm:$0xff] %vm19, 0.0
    $region17: #{music_transformer_forward.21} parent=1 // pred_fallthru
      _
    %v22 = vld [vmem:[#allocation2] sm:$0xff]
    %v23 = vld [vmem:[#allocation2 + $0x8] sm:$0xff]
    %v24 = vld [vmem:[%s0] sm:$0xff]
    %v25 = vld [vmem:[%s0 + $0x8] sm:$0xff]
    %v26 = vld [vmem:[%s1] sm:$0xff]
    %v27 = vld [vmem:[%s1 + $0x8] sm:$0xff]
    %v28 = vld [vmem:[%s1 + $0x10] sm:$0xff]
    %v29 = vld [vmem:[%s1 + $0x18] sm:$0xff]
    %vm30 = vcmask 261120
    %v32 = vsel %vm30, %v24, 0
    %v35 = vsel %vm30, %v25, 0
    %37 = vmatpush.msra.mxu0 0.0
    %38 = vmatpush.msra.mxu0 0.0
    %39 = vmatpush.msra.mxu0 0.0
    %40 = vmatpush.msra.mxu0 0.0
    %41 = vmatpush.msra.mxu0 0.0
    %42 = vmatpush.msra.mxu0 0.0
    %43 = vmatpush.msra.mxu0 0.0
    %44 = vmatpush.msra.mxu0 0.0
    %45 = vmatpush.msra.mxu0 0.0
    %46 = vmatpush.msra.mxu0 0.0
    %47 = vmatpush.msra.mxu0 0.0
    %48 = vmatpush.msra.mxu0 0.0
    %49 = vmatpush.msra.mxu0 %v29
    %50 = vmatpush.msra.mxu0 %v28
    %51 = vmatpush.msra.mxu0 %v27
    %52 = vmatpush.msra.mxu0 %v26
    %53 = vmatmul.f32.gmra.mxu0 %v32
    %v54 = vpop.f32.mrf.mxu0
    %v55 = vadd.f32 0.0, %v54
    %56 = vmatmul.f32.gmra.mxu0 %v35
    %v57 = vpop.f32.mrf.mxu0
    %v58 = vadd.f32 0.0, %v57
    %59 = vdwg.mxu0
    %v60 = vadd.f32 %v22, %v55
    %v61 = vadd.f32 %v23, %v58
    %vm62 = vcmask 326656
    %63 = vst.msk [vmem:[#allocation2] sm:$0xff] %vm62, %v60
    %64 = vst.msk [vmem:[#allocation2 + $0x8] sm:$0xff] %vm62, %v61
    // Predicated region
    $region18: #{music_transformer_forward.21} parent=1 // pred_check
      %p65 = pneg %p15
    $region19: #{music_transformer_forward.21} parent=1 // pred_check_branch
      %67 = sbr.rel (%p65) target = $region21
    $region20: #{music_transformer_forward.21} parent=1 // pred_region
      %v68 = vld [vmem:[#allocation2] sm:$0xff]
      %v69 = vld [vmem:[#allocation2 + $0x8] sm:$0xff]
      %v70 = vld [vmem:[%s2] sm:$0x1]
      %v72 = vperm.slane %v70, 0
      %v74 = vadd.f32 %v68, %v72
      %v75 = vadd.f32 %v69, %v72
      %76 = vst.msk [vmem:[#allocation3] sm:$0xff] %vm62, %v74
      %77 = vst.msk [vmem:[#allocation3 + $0x8] sm:$0xff] %vm62, %v75
    $region21: #{music_transformer_forward.21} parent=1 // pred_fallthru
      _
    // Predicated region
    $region22: #{music_transformer_forward.21} parent=1 // pred_check
      _
    $region23: #{music_transformer_forward.21} parent=1 // pred_check_branch
      %79 = sbr.rel (0) target = $region25
    $region24: #{music_transformer_forward.21} parent=1 // pred_region
      %81 = vsyncadd [#allocation4], 0
      %s82 = sshll.u32 [#allocation3], 4
      %s83 = int_to_ptr.vmem [resolvable:$true] %s82
      %s84 = sshll.u32 %s3, 4
      %s85 = int_to_ptr.hbm [resolvable:$true] %s84
      %90 = dma.vmem_to_hbm [thread:$0]  %s83, 256, %s85, [#allocation4], 128, 128, 8
    $region25: #{music_transformer_forward.21} parent=1 // pred_fallthru
      _
    // Predicated region
    $region26: #{music_transformer_forward.21} parent=1 // pred_check
      _
    $region27: #{music_transformer_forward.21} parent=1 // pred_check_branch
      %92 = sbr.rel (0) target = $region29
    $region28: #{music_transformer_forward.21} parent=1 // pred_region
      %94 = dma.done [#allocation4], 256
    $region29: #{music_transformer_forward.21} parent=1 // pred_fallthru
      _
    %95 = vsyncpa [#allocation4], 1

</llo_original>
